<compile_context>
chip_gen: v6e
topology: v6e:2x2x1
jax: 0.10.0
libtpu: 0.0.40
codegen_flags: <defaults>
</compile_context>

<pallas_src>
import functools
import math

import jax
import jax.numpy as jnp
import numpy as np
from jax import lax
from jax.experimental import pallas as pl
from jax.experimental.pallas import tpu as pltpu


# ---------------- tiling helper ------------------------------------------------

def _pick_tile(dim, preferred, align):
    """Largest tile <= preferred that is a multiple of `align` and divides
    `dim`; falls back to the full dim (always a legal BlockSpec block)."""
    t = min(preferred, dim)
    t -= t % align
    while t >= align:
        if dim % t == 0:
            return t
        t -= align
    return dim


# ---------------- shared LayerNorm math (torch-style: unbiased std + eps) ------

def _layernorm_f32(xn, g, beta, eps, feat):
    mean = jnp.mean(xn, axis=-1, keepdims=True)
    xc = xn - mean
    # torch.Tensor.std default is the unbiased estimator (divide by n-1),
    # and the module adds eps to std (not to var) -- keep that exactly.
    var = jnp.sum(xc * xc, axis=-1, keepdims=True) / (feat - 1)
    return g * xc / (jnp.sqrt(var) + eps) + beta


# ---------------- plain tiled linear (QKV projection) ---------------------------

def _linear_bias_kernel(x_ref, w_ref, b_ref, o_ref, acc_ref):
    k = pl.program_id(2)

    @pl.when(k == 0)
    def _():
        acc_ref[...] = jnp.zeros_like(acc_ref)

    acc_ref[...] += jnp.dot(x_ref[...], w_ref[...],
                            preferred_element_type=jnp.float32)

    @pl.when(k == pl.num_programs(2) - 1)
    def _():
        o_ref[...] = (acc_ref[...]
                      + b_ref[...].astype(jnp.float32)).astype(o_ref.dtype)


def linear(x, w, b, *, out_dtype=jnp.bfloat16):
    """y = x @ w + b.  x and w are expected to already be bf16 (weights are
    pre-converted once in prepare_params); f32 MXU accumulation.  Large blocks
    for the mem-bound regime; footprint stays far below scoped VMEM limits."""
    M, Din = x.shape
    Dout = w.shape[1]
    tm = _pick_tile(M, 512, 16)          # 16-aligned: bf16 LHS sublane packing
    tn = _pick_tile(Dout, 256, 128)
    tk = _pick_tile(Din, 1024, 128)
    grid = (M // tm, Dout // tn, Din // tk)
    return pl.pallas_call(
        _linear_bias_kernel,
        out_shape=jax.ShapeDtypeStruct((M, Dout), out_dtype),
        grid=grid,
        in_specs=[
            pl.BlockSpec((tm, tk), lambda i, j, k: (i, k)),
            pl.BlockSpec((tk, tn), lambda i, j, k: (k, j)),
            pl.BlockSpec((1, tn), lambda i, j, k: (0, j)),
        ],
        out_specs=pl.BlockSpec((tm, tn), lambda i, j, k: (i, j)),
        scratch_shapes=[pltpu.VMEM((tm, tn), jnp.float32)],
        compiler_params=pltpu.CompilerParams(
            dimension_semantics=("parallel", "parallel", "arbitrary")),
    )(x, w, b.reshape(1, Dout))


# ---------------- Wo projection + residual + LayerNorm (fused) ------------------

def _make_proj_residual_ln_kernel(eps, feat):
    def kernel(a_ref, w_ref, b_ref, res_ref, g_ref, beta_ref,
               x_ref, y_ref, acc_ref):
        k = pl.program_id(1)

        @pl.when(k == 0)
        def _():
            acc_ref[...] = jnp.zeros_like(acc_ref)

        acc_ref[...] += jnp.dot(a_ref[...], w_ref[...],
                                preferred_element_type=jnp.float32)

        @pl.when(k == pl.num_programs(1) - 1)
        def _():
            xn = (acc_ref[...] + b_ref[...].astype(jnp.float32)
                  + res_ref[...].astype(jnp.float32))
            x_ref[...] = xn.astype(x_ref.dtype)          # new residual stream
            y = _layernorm_f32(xn, g_ref[...].astype(jnp.float32),
                               beta_ref[...].astype(jnp.float32), eps, feat)
            y_ref[...] = y.astype(y_ref.dtype)           # normalized FFN input

    return kernel


def proj_residual_ln(a, w, b, residual, ln_a, ln_b, *, eps=1e-6,
                     x_dtype=jnp.float32, y_dtype=jnp.bfloat16):
    """(x_new, y) where x_new = residual + a @ w + b, y = LN(x_new)."""
    M, K = a.shape
    D = w.shape[1]
    tm = _pick_tile(M, 256, 16)
    tk = _pick_tile(K, 512, 128)
    grid = (M // tm, K // tk)
    return pl.pallas_call(
        _make_proj_residual_ln_kernel(eps, D),
        out_shape=(jax.ShapeDtypeStruct((M, D), x_dtype),
                   jax.ShapeDtypeStruct((M, D), y_dtype)),
        grid=grid,
        in_specs=[
            pl.BlockSpec((tm, tk), lambda i, k: (i, k)),   # attention output
            pl.BlockSpec((tk, D), lambda i, k: (k, 0)),    # w_o
            pl.BlockSpec((1, D), lambda i, k: (0, 0)),     # b_o
            pl.BlockSpec((tm, D), lambda i, k: (i, 0)),    # residual stream
            pl.BlockSpec((1, D), lambda i, k: (0, 0)),     # ln scale
            pl.BlockSpec((1, D), lambda i, k: (0, 0)),     # ln bias
        ],
        out_specs=(pl.BlockSpec((tm, D), lambda i, k: (i, 0)),
                   pl.BlockSpec((tm, D), lambda i, k: (i, 0))),
        scratch_shapes=[pltpu.VMEM((tm, D), jnp.float32)],
        compiler_params=pltpu.CompilerParams(
            dimension_semantics=("parallel", "arbitrary")),
    )(a, w, b.reshape(1, D), residual, ln_a.reshape(1, D), ln_b.reshape(1, D))


# ---------------- fused FFN (W1 -> ReLU -> W2) + residual + LayerNorm -----------

def _make_ffn_residual_ln_kernel(eps, feat):
    def kernel(y_ref, w1_ref, b1_ref, w2_ref, b2_ref, res_ref, g_ref, beta_ref,
               x_ref, yout_ref, acc_ref):
        k = pl.program_id(1)

        @pl.when(k == 0)
        def _():
            acc_ref[...] = jnp.zeros_like(acc_ref)

        # h tile = relu(y @ W1[:, k] + b1[k]); never materialized in HBM.
        h = jnp.dot(y_ref[...], w1_ref[...], preferred_element_type=jnp.float32)
        h = jnp.maximum(h + b1_ref[...].astype(jnp.float32), 0.0)
        acc_ref[...] += jnp.dot(h.astype(jnp.bfloat16), w2_ref[...],
                                preferred_element_type=jnp.float32)

        @pl.when(k == pl.num_programs(1) - 1)
        def _():
            xn = (acc_ref[...] + b2_ref[...].astype(jnp.float32)
                  + res_ref[...].astype(jnp.float32))
            x_ref[...] = xn.astype(x_ref.dtype)          # new residual stream
            y = _layernorm_f32(xn, g_ref[...].astype(jnp.float32),
                               beta_ref[...].astype(jnp.float32), eps, feat)
            yout_ref[...] = y.astype(yout_ref.dtype)     # next sublayer's LN

    return kernel


def ffn_residual_ln(y, w1, b1, w2, b2, residual, ln_a, ln_b, *, eps=1e-6,
                    x_dtype=jnp.float32, y_dtype=jnp.bfloat16):
    """(x_new, y_next): x_new = residual + relu(y@W1+b1)@W2+b2, y_next = LN(x_new)."""
    M, D = y.shape
    d_ff = w1.shape[1]
    tm = _pick_tile(M, 256, 16)
    tk = _pick_tile(d_ff, 512, 128)
    grid = (M // tm, d_ff // tk)
    return pl.pallas_call(
        _make_ffn_residual_ln_kernel(eps, D),
        out_shape=(jax.ShapeDtypeStruct((M, D), x_dtype),
                   jax.ShapeDtypeStruct((M, D), y_dtype)),
        grid=grid,
        in_specs=[
            pl.BlockSpec((tm, D), lambda i, k: (i, 0)),    # normalized input
            pl.BlockSpec((D, tk), lambda i, k: (0, k)),    # w_ff1
            pl.BlockSpec((1, tk), lambda i, k: (0, k)),    # b_ff1
            pl.BlockSpec((tk, D), lambda i, k: (k, 0)),    # w_ff2
            pl.BlockSpec((1, D), lambda i, k: (0, 0)),     # b_ff2
            pl.BlockSpec((tm, D), lambda i, k: (i, 0)),    # residual stream
            pl.BlockSpec((1, D), lambda i, k: (0, 0)),     # ln scale
            pl.BlockSpec((1, D), lambda i, k: (0, 0)),     # ln bias
        ],
        out_specs=(pl.BlockSpec((tm, D), lambda i, k: (i, 0)),
                   pl.BlockSpec((tm, D), lambda i, k: (i, 0))),
        scratch_shapes=[pltpu.VMEM((tm, D), jnp.float32)],
        compiler_params=pltpu.CompilerParams(
            dimension_semantics=("parallel", "arbitrary")),
    )(y, w1, b1.reshape(1, d_ff), w2, b2.reshape(1, D),
      residual, ln_a.reshape(1, D), ln_b.reshape(1, D))


# ---------------- standalone LayerNorm (only for the very first pre-norm) -------

def _make_layernorm_kernel(eps, feat):
    def kernel(x_ref, g_ref, b_ref, o_ref):
        y = _layernorm_f32(x_ref[...].astype(jnp.float32),
                           g_ref[...].astype(jnp.float32),
                           b_ref[...].astype(jnp.float32), eps, feat)
        o_ref[...] = y.astype(o_ref.dtype)
    return kernel


def layer_norm(x, a, b, *, eps=1e-6, out_dtype=jnp.bfloat16):
    M, D = x.shape
    tm = _pick_tile(M, 512, 8)
    return pl.pallas_call(
        _make_layernorm_kernel(eps, D),
        out_shape=jax.ShapeDtypeStruct((M, D), out_dtype),
        grid=(M // tm,),
        in_specs=[
            pl.BlockSpec((tm, D), lambda i: (i, 0)),
            pl.BlockSpec((1, D), lambda i: (0, 0)),
            pl.BlockSpec((1, D), lambda i: (0, 0)),
        ],
        out_specs=pl.BlockSpec((tm, D), lambda i: (i, 0)),
        compiler_params=pltpu.CompilerParams(dimension_semantics=("parallel",)),
    )(x, a.reshape(1, D), b.reshape(1, D))


# ---------------- multi-head attention on fused QKV ----------------------------

def _make_attention_kernel(num_heads, d_k, d_model):
    def kernel(qkv_ref, o_ref, o_acc):
        qkv = qkv_ref[0]                         # (S, 3*d_model), bf16
        # 1/sqrt(d_k) is pre-folded into the Q columns of w_qkv/b_qkv, so no
        # in-kernel upcast/scale/downcast chain is needed.
        # TODO(synk): for long S (v7x: 64 MiB VMEM) switch to a flash-style
        # online-softmax with a query/KV grid; the full per-head (S, S) f32
        # score tile here assumes modest S.
        # TODO(synk): with d_k < 128 the per-head slices start at non-128-
        # aligned lane offsets; a head-major (B, 3, H, S, d_k) layout with
        # heads on a grid axis would avoid the per-head cross-lane relayouts.
        for hd in range(num_heads):
            q = qkv[:, hd * d_k:(hd + 1) * d_k]
            k = qkv[:, d_model + hd * d_k:d_model + (hd + 1) * d_k]
            v = qkv[:, 2 * d_model + hd * d_k:2 * d_model + (hd + 1) * d_k]
            # contract on d_k of both operands -> no explicit k.T / XLU pass
            scores = lax.dot_general(
                q, k, dimension_numbers=(((1,), (1,)), ((), ())),
                preferred_element_type=jnp.float32)            # (S, S), f32
            scores = scores - jnp.max(scores, axis=-1, keepdims=True)
            p = jnp.exp(scores)
            p = p * pl.reciprocal(jnp.sum(p, axis=-1, keepdims=True),
                                  approx=True)
            # TODO(synk): dropout on p_attn skipped (eval-mode semantics).
            # Stream each head directly into the (S, d_model) scratch instead
            # of concatenating -> vreg pressure stays at one head.
            o_acc[:, hd * d_k:(hd + 1) * d_k] = jnp.dot(
                p.astype(jnp.bfloat16), v, preferred_element_type=jnp.float32)
        o_ref[0] = o_acc[...].astype(o_ref.dtype)   # single lane-dense store

    return kernel


def attention(qkv, *, num_heads, d_model, out_dtype=jnp.bfloat16):
    """qkv: (B, S, 3*d_model) -> (B, S, d_model), one batch per grid step."""
    B, S, D3 = qkv.shape
    d_k = d_model // num_heads
    return pl.pallas_call(
        _make_attention_kernel(num_heads, d_k, d_model),
        out_shape=jax.ShapeDtypeStruct((B, S, d_model), out_dtype),
        grid=(B,),
        in_specs=[pl.BlockSpec((1, S, D3), lambda b: (b, 0, 0))],
        out_specs=pl.BlockSpec((1, S, d_model), lambda b: (b, 0, 0)),
        scratch_shapes=[pltpu.VMEM((S, d_model), jnp.float32)],
        compiler_params=pltpu.CompilerParams(dimension_semantics=("parallel",)),
    )(qkv)


# ---------------- parameters, one-time kernel-layout prep, full forward --------

def init_params(key, d_model, n_layers):
    d_ff = 4 * d_model

    def linear_init(k, din, dout):
        kw, kb = jax.random.split(k)
        s = 1.0 / math.sqrt(din)
        return (jax.random.uniform(kw, (din, dout), jnp.float32, -s, s),
                jax.random.uniform(kb, (dout,), jnp.float32, -s, s))

    layers = []
    for lk in jax.random.split(key, n_layers):
        k_q, k_k, k_v, k_o, k_f1, k_f2 = jax.random.split(lk, 6)
        wq, bq = linear_init(k_q, d_model, d_model)
        wk, bk = linear_init(k_k, d_model, d_model)
        wv, bv = linear_init(k_v, d_model, d_model)
        wo, bo = linear_init(k_o, d_model, d_model)
        w1, b1 = linear_init(k_f1, d_model, d_ff)
        w2, b2 = linear_init(k_f2, d_ff, d_model)
        layers.append({
            # fused QKV projection: one (D, 3D) matmul instead of three (D, D)
            "w_qkv": jnp.concatenate([wq, wk, wv], axis=1),
            "b_qkv": jnp.concatenate([bq, bk, bv], axis=0),
            "w_o": wo, "b_o": bo,
            "w_ff1": w1, "b_ff1": b1,
            "w_ff2": w2, "b_ff2": b2,
            "ln1_a": jnp.ones((d_model,), jnp.float32),
            "ln1_b": jnp.zeros((d_model,), jnp.float32),
            "ln2_a": jnp.ones((d_model,), jnp.float32),
            "ln2_b": jnp.zeros((d_model,), jnp.float32),
        })
    return {"layers": layers,
            "ln_f_a": jnp.ones((d_model,), jnp.float32),
            "ln_f_b": jnp.zeros((d_model,), jnp.float32)}


def prepare_params(params, num_heads):
    """One-time conversion to kernel layout: bf16 matmul weights (no per-call
    .astype passes) and 1/sqrt(d_k) folded into the Q columns of w_qkv/b_qkv.
    Biases / LN params stay f32 (tiny; added to the f32 accumulator)."""
    d_model = params["layers"][0]["w_o"].shape[0]
    d_k = d_model // num_heads
    scale = 1.0 / math.sqrt(d_k)
    qscale = jnp.concatenate([jnp.full((d_model,), scale, jnp.float32),
                              jnp.ones((2 * d_model,), jnp.float32)])
    layers = []
    for l in params["layers"]:
        layers.append({
            "w_qkv": (l["w_qkv"] * qscale[None, :]).astype(jnp.bfloat16),
            "b_qkv": (l["b_qkv"] * qscale).astype(jnp.float32),
            "w_o": l["w_o"].astype(jnp.bfloat16), "b_o": l["b_o"],
            "w_ff1": l["w_ff1"].astype(jnp.bfloat16), "b_ff1": l["b_ff1"],
            "w_ff2": l["w_ff2"].astype(jnp.bfloat16), "b_ff2": l["b_ff2"],
            "ln1_a": l["ln1_a"], "ln1_b": l["ln1_b"],
            "ln2_a": l["ln2_a"], "ln2_b": l["ln2_b"],
        })
    return {"layers": layers,
            "ln_f_a": params["ln_f_a"], "ln_f_b": params["ln_f_b"]}


def transformer_forward(x, kparams, *, num_heads):
    """Transformer(hidden_dim, N, H).forward(x, mask=None) in eval mode.
    `kparams` must come from prepare_params()."""
    B, S, D = x.shape
    layers = kparams["layers"]
    n_layers = len(layers)
    x2d = x.reshape(B * S, D).astype(jnp.float32)   # residual stream, f32
    # First pre-norm (layer 0's LN1).  Every subsequent LayerNorm is fused
    # into the epilogue of the preceding residual matmul kernel.
    y = layer_norm(x2d, layers[0]["ln1_a"], layers[0]["ln1_b"],
                   out_dtype=jnp.bfloat16)
    for li, layer in enumerate(layers):
        # ---- self-attention sublayer: x + Wo(attn(QKV(norm(x)))) ----
        qkv = linear(y, layer["w_qkv"], layer["b_qkv"], out_dtype=jnp.bfloat16)
        attn = attention(qkv.reshape(B, S, 3 * D),
                         num_heads=num_heads, d_model=D)       # (B, S, D) bf16
        # Wo projection + residual + LN2, one kernel -> new x + normalized y.
        x2d, y = proj_residual_ln(attn.reshape(B * S, D), layer["w_o"],
                                  layer["b_o"], x2d,
                                  layer["ln2_a"], layer["ln2_b"])
        # ---- feed-forward sublayer: x + W2(relu(W1(norm(x)))) ----
        # Fully fused: the (M, 4D) hidden activation never hits HBM; epilogue
        # adds bias2 + residual and computes the next sublayer's LayerNorm
        # (next layer's LN1, or the final LN for the last layer).
        if li + 1 < n_layers:
            ln_a, ln_b = layers[li + 1]["ln1_a"], layers[li + 1]["ln1_b"]
            y_dtype = jnp.bfloat16
        else:
            ln_a, ln_b = kparams["ln_f_a"], kparams["ln_f_b"]
            y_dtype = jnp.float32            # final LN output = module output
        # TODO(synk): the residual-stream output of the last layer's FFN kernel
        # is unused (only the final-LN output is) but is still written to HBM.
        x2d, y = ffn_residual_ln(y, layer["w_ff1"], layer["b_ff1"],
                                 layer["w_ff2"], layer["b_ff2"], x2d,
                                 ln_a, ln_b, y_dtype=y_dtype)
    return y.reshape(B, S, D)


# ---------------- pure-JAX f32 reference ---------------------------------------

def reference(x, params, num_heads):
    B, S, D = x.shape
    d_k = D // num_heads
    eps = 1e-6

    def ln(t, a, b):
        mean = t.mean(-1, keepdims=True)
        std = jnp.std(t, axis=-1, keepdims=True, ddof=1)
        return a * (t - mean) / (std + eps) + b

    def mha(y, layer):
        qkv = y @ layer["w_qkv"] + layer["b_qkv"]
        q, k, v = jnp.split(qkv, 3, axis=-1)
        split = lambda t: t.reshape(B, S, num_heads, d_k).transpose(0, 2, 1, 3)
        q, k, v = split(q), split(k), split(v)
        scores = jnp.einsum("bhqd,bhkd->bhqk", q, k) / math.sqrt(d_k)
        p = jax.nn.softmax(scores, axis=-1)
        o = jnp.einsum("bhqk,bhkd->bhqd", p, v)
        o = o.transpose(0, 2, 1, 3).reshape(B, S, D)
        return o @ layer["w_o"] + layer["b_o"]

    for layer in params["layers"]:
        x = x + mha(ln(x, layer["ln1_a"], layer["ln1_b"]), layer)
        y = ln(x, layer["ln2_a"], layer["ln2_b"])
        x = x + (jax.nn.relu(y @ layer["w_ff1"] + layer["b_ff1"])
                 @ layer["w_ff2"] + layer["b_ff2"])
    return ln(x, params["ln_f_a"], params["ln_f_b"])


if __name__ == "__main__":
    B, S, D_MODEL, N_LAYERS, N_HEADS = 2, 8, 32, 2, 4

    root = jax.random.PRNGKey(0)
    k_x, k_p = jax.random.split(root)
    x = jax.random.normal(k_x, (B, S, D_MODEL), jnp.float32)
    params = init_params(k_p, D_MODEL, N_LAYERS)
    kparams = prepare_params(params, N_HEADS)   # one-time bf16 / scale folding

    fwd = jax.jit(functools.partial(transformer_forward, num_heads=N_HEADS))
    out = jax.block_until_ready(fwd(x, kparams))

    ref = jax.block_until_ready(reference(x, params, N_HEADS))
    # loose tolerance: kernels use bf16 MXU operands (f32 accumulation/softmax)
    np.testing.assert_allclose(np.asarray(out), np.asarray(ref),
                               rtol=1e-1, atol=1e-1)
    print("KERNEL_OK")
</pallas_src>

<mosaic_0001>
module attributes {stable_mosaic.version = 11 : i64} {
  func.func @kernel(%arg0: i32, %arg1: i32, %arg2: memref<16x32xbf16, #tpu.memory_space<vmem>>, %arg3: memref<32x32xbf16, #tpu.memory_space<vmem>>, %arg4: memref<1x32xf32, #tpu.memory_space<vmem>>, %arg5: memref<16x32xf32, #tpu.memory_space<vmem>>, %arg6: memref<1x32xf32, #tpu.memory_space<vmem>>, %arg7: memref<1x32xf32, #tpu.memory_space<vmem>>, %arg8: memref<16x32xf32, #tpu.memory_space<vmem>>, %arg9: memref<16x32xbf16, #tpu.memory_space<vmem>>, %arg10: memref<16x32xf32, #tpu.memory_space<vmem>>) attributes {dimension_semantics = [#tpu.dimension_semantics<parallel>, #tpu.dimension_semantics<arbitrary>], iteration_bounds = array<i64: 1, 1>, scalar_prefetch = 0 : i64, scratch_operands = 1 : i64, tpu.core_type = #tpu.core_type<tc>, window_params = [{transform_indices = @transform_0, window_bounds = array<i64: 16, 32>}, {transform_indices = @transform_1, window_bounds = array<i64: 32, 32>}, {pipeline_mode = #tpu.pipeline_mode<synchronous>, transform_indices = @transform_2, window_bounds = array<i64: 1, 32>}, {transform_indices = @transform_3, window_bounds = array<i64: 16, 32>}, {pipeline_mode = #tpu.pipeline_mode<synchronous>, transform_indices = @transform_4, window_bounds = array<i64: 1, 32>}, {pipeline_mode = #tpu.pipeline_mode<synchronous>, transform_indices = @transform_5, window_bounds = array<i64: 1, 32>}, {transform_indices = @transform_6, window_bounds = array<i64: 16, 32>}, {transform_indices = @transform_7, window_bounds = array<i64: 16, 32>}]} {
    %c0_i32 = arith.constant 0 : i32
    %0 = arith.cmpi eq, %arg1, %c0_i32 : i32
    %1 = arith.extui %0 : i1 to i32
    %c0_i32_0 = arith.constant 0 : i32
    %2 = arith.cmpi ne, %1, %c0_i32_0 : i32
    scf.if %2 {
      %cst_10 = arith.constant 0.000000e+00 : f32
      %12 = vector.broadcast %cst_10 : f32 to vector<16x32xf32>
      %c0_11 = arith.constant 0 : index
      %c0_12 = arith.constant 0 : index
      %13 = vector.load %arg10[%c0_11, %c0_12] : memref<16x32xf32, #tpu.memory_space<vmem>>, vector<16x32xf32>
      tpu.vector_store %arg10[%c0_11, %c0_12], %12 {strides = array<i32>} : memref<16x32xf32, #tpu.memory_space<vmem>>, vector<16x32xf32>,
    } else {
    }
    %c0 = arith.constant 0 : index
    %c0_1 = arith.constant 0 : index
    %3 = vector.load %arg10[%c0, %c0_1] : memref<16x32xf32, #tpu.memory_space<vmem>>, vector<16x32xf32>
    %c0_2 = arith.constant 0 : index
    %c0_3 = arith.constant 0 : index
    %4 = vector.load %arg2[%c0_2, %c0_3] : memref<16x32xbf16, #tpu.memory_space<vmem>>, vector<16x32xbf16>
    %c0_4 = arith.constant 0 : index
    %c0_5 = arith.constant 0 : index
    %5 = vector.load %arg3[%c0_4, %c0_5] : memref<32x32xbf16, #tpu.memory_space<vmem>>, vector<32x32xbf16>
    %cst = arith.constant dense<0.000000e+00> : vector<16x32xf32>
    %6 = tpu.matmul %4, %5, %cst {dimension_numbers = #tpu.dot_dimension_numbers<[1], [0], [0], [1], [0, 0, 1, 1], [], []>} : vector<16x32xbf16>, vector<32x32xbf16>, vector<16x32xf32> -> vector<16x32xf32>
    %7 = arith.addf %3, %6 : vector<16x32xf32>
    %c0_6 = arith.constant 0 : index
    %c0_7 = arith.constant 0 : index
    %8 = vector.load %arg10[%c0_6, %c0_7] : memref<16x32xf32, #tpu.memory_space<vmem>>, vector<16x32xf32>
    tpu.vector_store %arg10[%c0_6, %c0_7], %7 {strides = array<i32>} : memref<16x32xf32, #tpu.memory_space<vmem>>, vector<16x32xf32>,
    %c0_i32_8 = arith.constant 0 : i32
    %9 = arith.cmpi eq, %arg1, %c0_i32_8 : i32
    %10 = arith.extui %9 : i1 to i32
    %c0_i32_9 = arith.constant 0 : i32
    %11 = arith.cmpi ne, %10, %c0_i32_9 : i32
    scf.if %11 {
      %c0_10 = arith.constant 0 : index
      %c0_11 = arith.constant 0 : index
      %12 = vector.load %arg10[%c0_10, %c0_11] : memref<16x32xf32, #tpu.memory_space<vmem>>, vector<16x32xf32>
      %c0_12 = arith.constant 0 : index
      %c0_13 = arith.constant 0 : index
      %13 = vector.load %arg4[%c0_12, %c0_13] : memref<1x32xf32, #tpu.memory_space<vmem>>, vector<1x32xf32>
      %14 = vector.broadcast %13 : vector<1x32xf32> to vector<16x32xf32>
      %15 = arith.addf %12, %14 : vector<16x32xf32>
      %c0_14 = arith.constant 0 : index
      %c0_15 = arith.constant 0 : index
      %16 = vector.load %arg5[%c0_14, %c0_15] : memref<16x32xf32, #tpu.memory_space<vmem>>, vector<16x32xf32>
      %17 = arith.addf %15, %16 : vector<16x32xf32>
      %c0_16 = arith.constant 0 : index
      %c0_17 = arith.constant 0 : index
      %18 = vector.load %arg8[%c0_16, %c0_17] : memref<16x32xf32, #tpu.memory_space<vmem>>, vector<16x32xf32>
      tpu.vector_store %arg8[%c0_16, %c0_17], %17 {strides = array<i32>} : memref<16x32xf32, #tpu.memory_space<vmem>>, vector<16x32xf32>,
      %c0_18 = arith.constant 0 : index
      %c0_19 = arith.constant 0 : index
      %19 = vector.load %arg6[%c0_18, %c0_19] : memref<1x32xf32, #tpu.memory_space<vmem>>, vector<1x32xf32>
      %c0_20 = arith.constant 0 : index
      %c0_21 = arith.constant 0 : index
      %20 = vector.load %arg7[%c0_20, %c0_21] : memref<1x32xf32, #tpu.memory_space<vmem>>, vector<1x32xf32>
      %cst_22 = arith.constant dense<0.000000e+00> : vector<16xf32>
      %21 = vector.multi_reduction <add>, %17, %cst_22 [1] : vector<16x32xf32> to vector<16xf32>
      %22 = vector.shape_cast %21 : vector<16xf32> to vector<16x1xf32>
      %cst_23 = arith.constant 3.200000e+01 : f32
      %23 = vector.broadcast %cst_23 : f32 to vector<16x1xf32>
      %24 = arith.divf %22, %23 : vector<16x1xf32>
      %25 = vector.broadcast %24 : vector<16x1xf32> to vector<16x32xf32>
      %26 = arith.subf %17, %25 : vector<16x32xf32>
      %27 = arith.mulf %26, %26 : vector<16x32xf32>
      %cst_24 = arith.constant dense<0.000000e+00> : vector<16xf32>
      %28 = vector.multi_reduction <add>, %27, %cst_24 [1] : vector<16x32xf32> to vector<16xf32>
      %29 = vector.shape_cast %28 : vector<16xf32> to vector<16x1xf32>
      %cst_25 = arith.constant 3.100000e+01 : f32
      %30 = vector.broadcast %cst_25 : f32 to vector<16x1xf32>
      %31 = arith.divf %29, %30 : vector<16x1xf32>
      %32 = vector.broadcast %19 : vector<1x32xf32> to vector<16x32xf32>
      %33 = arith.mulf %32, %26 : vector<16x32xf32>
      %34 = math.sqrt %31 : vector<16x1xf32>
      %cst_26 = arith.constant 9.99999997E-7 : f32
      %35 = vector.broadcast %cst_26 : f32 to vector<16x1xf32>
      %36 = arith.addf %34, %35 : vector<16x1xf32>
      %37 = vector.broadcast %36 : vector<16x1xf32> to vector<16x32xf32>
      %38 = arith.divf %33, %37 : vector<16x32xf32>
      %39 = vector.broadcast %20 : vector<1x32xf32> to vector<16x32xf32>
      %40 = arith.addf %38, %39 : vector<16x32xf32>
      %41 = arith.truncf %40 : vector<16x32xf32> to vector<16x32xbf16>
      %c0_27 = arith.constant 0 : index
      %c0_28 = arith.constant 0 : index
      %42 = vector.load %arg9[%c0_27, %c0_28] : memref<16x32xbf16, #tpu.memory_space<vmem>>, vector<16x32xbf16>
      tpu.vector_store %arg9[%c0_27, %c0_28], %41 {strides = array<i32>} : memref<16x32xbf16, #tpu.memory_space<vmem>>, vector<16x32xbf16>,
    } else {
    }
    return
  }
  func.func @transform_0(%arg0: i32, %arg1: i32) -> (i32, i32) {
    %c0_i32 = arith.constant 0 : i32
    return %arg0, %arg1 : i32, i32
  }
  func.func @transform_1(%arg0: i32, %arg1: i32) -> (i32, i32) {
    %c0_i32 = arith.constant 0 : i32
    %c0_i32_0 = arith.constant 0 : i32
    return %arg1, %c0_i32 : i32, i32
  }
  func.func @transform_2(%arg0: i32, %arg1: i32) -> (i32, i32) {
    %c0_i32 = arith.constant 0 : i32
    %c0_i32_0 = arith.constant 0 : i32
    %c0_i32_1 = arith.constant 0 : i32
    return %c0_i32, %c0_i32_0 : i32, i32
  }
  func.func @transform_3(%arg0: i32, %arg1: i32) -> (i32, i32) {
    %c0_i32 = arith.constant 0 : i32
    %c0_i32_0 = arith.constant 0 : i32
    return %arg0, %c0_i32 : i32, i32
  }
  func.func @transform_4(%arg0: i32, %arg1: i32) -> (i32, i32) {
    %c0_i32 = arith.constant 0 : i32
    %c0_i32_0 = arith.constant 0 : i32
    %c0_i32_1 = arith.constant 0 : i32
    return %c0_i32, %c0_i32_0 : i32, i32
  }
  func.func @transform_5(%arg0: i32, %arg1: i32) -> (i32, i32) {
    %c0_i32 = arith.constant 0 : i32
    %c0_i32_0 = arith.constant 0 : i32
    %c0_i32_1 = arith.constant 0 : i32
    return %c0_i32, %c0_i32_0 : i32, i32
  }
  func.func @transform_6(%arg0: i32, %arg1: i32) -> (i32, i32) {
    %c0_i32 = arith.constant 0 : i32
    %c0_i32_0 = arith.constant 0 : i32
    return %arg0, %c0_i32 : i32, i32
  }
  func.func @transform_7(%arg0: i32, %arg1: i32) -> (i32, i32) {
    %c0_i32 = arith.constant 0 : i32
    %c0_i32_0 = arith.constant 0 : i32
    return %arg0, %c0_i32 : i32, i32
  }
}

module attributes {stable_mosaic.version = 11 : i64} {
  func.func @kernel(%arg0: i32, %arg1: memref<16x32xf32, #tpu.memory_space<vmem>>, %arg2: memref<1x32xf32, #tpu.memory_space<vmem>>, %arg3: memref<1x32xf32, #tpu.memory_space<vmem>>, %arg4: memref<16x32xbf16, #tpu.memory_space<vmem>>) attributes {dimension_semantics = [#tpu.dimension_semantics<parallel>], iteration_bounds = array<i64: 1>, scalar_prefetch = 0 : i64, scratch_operands = 0 : i64, tpu.core_type = #tpu.core_type<tc>, window_params = [{transform_indices = @transform_0, window_bounds = array<i64: 16, 32>}, {pipeline_mode = #tpu.pipeline_mode<synchronous>, transform_indices = @transform_1, window_bounds = array<i64: 1, 32>}, {pipeline_mode = #tpu.pipeline_mode<synchronous>, transform_indices = @transform_2, window_bounds = array<i64: 1, 32>}, {transform_indices = @transform_3, window_bounds = array<i64: 16, 32>}]} {
    %c0 = arith.constant 0 : index
    %c0_0 = arith.constant 0 : index
    %0 = vector.load %arg1[%c0, %c0_0] : memref<16x32xf32, #tpu.memory_space<vmem>>, vector<16x32xf32>
    %c0_1 = arith.constant 0 : index
    %c0_2 = arith.constant 0 : index
    %1 = vector.load %arg2[%c0_1, %c0_2] : memref<1x32xf32, #tpu.memory_space<vmem>>, vector<1x32xf32>
    %c0_3 = arith.constant 0 : index
    %c0_4 = arith.constant 0 : index
    %2 = vector.load %arg3[%c0_3, %c0_4] : memref<1x32xf32, #tpu.memory_space<vmem>>, vector<1x32xf32>
    %cst = arith.constant dense<0.000000e+00> : vector<16xf32>
    %3 = vector.multi_reduction <add>, %0, %cst [1] : vector<16x32xf32> to vector<16xf32>
    %4 = vector.shape_cast %3 : vector<16xf32> to vector<16x1xf32>
    %cst_5 = arith.constant 3.200000e+01 : f32
    %5 = vector.broadcast %cst_5 : f32 to vector<16x1xf32>
    %6 = arith.divf %4, %5 : vector<16x1xf32>
    %7 = vector.broadcast %6 : vector<16x1xf32> to vector<16x32xf32>
    %8 = arith.subf %0, %7 : vector<16x32xf32>
    %9 = arith.mulf %8, %8 : vector<16x32xf32>
    %cst_6 = arith.constant dense<0.000000e+00> : vector<16xf32>
    %10 = vector.multi_reduction <add>, %9, %cst_6 [1] : vector<16x32xf32> to vector<16xf32>
    %11 = vector.shape_cast %10 : vector<16xf32> to vector<16x1xf32>
    %cst_7 = arith.constant 3.100000e+01 : f32
    %12 = vector.broadcast %cst_7 : f32 to vector<16x1xf32>
    %13 = arith.divf %11, %12 : vector<16x1xf32>
    %14 = vector.broadcast %1 : vector<1x32xf32> to vector<16x32xf32>
    %15 = arith.mulf %14, %8 : vector<16x32xf32>
    %16 = math.sqrt %13 : vector<16x1xf32>
    %cst_8 = arith.constant 9.99999997E-7 : f32
    %17 = vector.broadcast %cst_8 : f32 to vector<16x1xf32>
    %18 = arith.addf %16, %17 : vector<16x1xf32>
    %19 = vector.broadcast %18 : vector<16x1xf32> to vector<16x32xf32>
    %20 = arith.divf %15, %19 : vector<16x32xf32>
    %21 = vector.broadcast %2 : vector<1x32xf32> to vector<16x32xf32>
    %22 = arith.addf %20, %21 : vector<16x32xf32>
    %23 = arith.truncf %22 : vector<16x32xf32> to vector<16x32xbf16>
    %c0_9 = arith.constant 0 : index
    %c0_10 = arith.constant 0 : index
    %24 = vector.load %arg4[%c0_9, %c0_10] : memref<16x32xbf16, #tpu.memory_space<vmem>>, vector<16x32xbf16>
    tpu.vector_store %arg4[%c0_9, %c0_10], %23 {strides = array<i32>} : memref<16x32xbf16, #tpu.memory_space<vmem>>, vector<16x32xbf16>,
    return
  }
  func.func @transform_0(%arg0: i32) -> (i32, i32) {
    %c0_i32 = arith.constant 0 : i32
    %c0_i32_0 = arith.constant 0 : i32
    return %arg0, %c0_i32 : i32, i32
  }
  func.func @transform_1(%arg0: i32) -> (i32, i32) {
    %c0_i32 = arith.constant 0 : i32
    %c0_i32_0 = arith.constant 0 : i32
    %c0_i32_1 = arith.constant 0 : i32
    return %c0_i32, %c0_i32_0 : i32, i32
  }
  func.func @transform_2(%arg0: i32) -> (i32, i32) {
    %c0_i32 = arith.constant 0 : i32
    %c0_i32_0 = arith.constant 0 : i32
    %c0_i32_1 = arith.constant 0 : i32
    return %c0_i32, %c0_i32_0 : i32, i32
  }
  func.func @transform_3(%arg0: i32) -> (i32, i32) {
    %c0_i32 = arith.constant 0 : i32
    %c0_i32_0 = arith.constant 0 : i32
    return %arg0, %c0_i32 : i32, i32
  }
}

module attributes {stable_mosaic.version = 11 : i64} {
  func.func @_linear_bias_kernel(%arg0: i32, %arg1: i32, %arg2: i32, %arg3: memref<16x32xbf16, #tpu.memory_space<vmem>>, %arg4: memref<32x96xbf16, #tpu.memory_space<vmem>>, %arg5: memref<1x96xf32, #tpu.memory_space<vmem>>, %arg6: memref<16x96xbf16, #tpu.memory_space<vmem>>, %arg7: memref<16x96xf32, #tpu.memory_space<vmem>>) attributes {dimension_semantics = [#tpu.dimension_semantics<parallel>, #tpu.dimension_semantics<parallel>, #tpu.dimension_semantics<arbitrary>], iteration_bounds = array<i64: 1, 1, 1>, scalar_prefetch = 0 : i64, scratch_operands = 1 : i64, tpu.core_type = #tpu.core_type<tc>, window_params = [{transform_indices = @transform_0, window_bounds = array<i64: 16, 32>}, {transform_indices = @transform_1, window_bounds = array<i64: 32, 96>}, {transform_indices = @transform_2, window_bounds = array<i64: 1, 96>}, {transform_indices = @transform_3, window_bounds = array<i64: 16, 96>}]} {
    %c0_i32 = arith.constant 0 : i32
    %0 = arith.cmpi eq, %arg2, %c0_i32 : i32
    %1 = arith.extui %0 : i1 to i32
    %c0_i32_0 = arith.constant 0 : i32
    %2 = arith.cmpi ne, %1, %c0_i32_0 : i32
    scf.if %2 {
      %cst_10 = arith.constant 0.000000e+00 : f32
      %12 = vector.broadcast %cst_10 : f32 to vector<16x96xf32>
      %c0_11 = arith.constant 0 : index
      %c0_12 = arith.constant 0 : index
      %13 = vector.load %arg7[%c0_11, %c0_12] : memref<16x96xf32, #tpu.memory_space<vmem>>, vector<16x96xf32>
      tpu.vector_store %arg7[%c0_11, %c0_12], %12 {strides = array<i32>} : memref<16x96xf32, #tpu.memory_space<vmem>>, vector<16x96xf32>,
    } else {
    }
    %c0 = arith.constant 0 : index
    %c0_1 = arith.constant 0 : index
    %3 = vector.load %arg7[%c0, %c0_1] : memref<16x96xf32, #tpu.memory_space<vmem>>, vector<16x96xf32>
    %c0_2 = arith.constant 0 : index
    %c0_3 = arith.constant 0 : index
    %4 = vector.load %arg3[%c0_2, %c0_3] : memref<16x32xbf16, #tpu.memory_space<vmem>>, vector<16x32xbf16>
    %c0_4 = arith.constant 0 : index
    %c0_5 = arith.constant 0 : index
    %5 = vector.load %arg4[%c0_4, %c0_5] : memref<32x96xbf16, #tpu.memory_space<vmem>>, vector<32x96xbf16>
    %cst = arith.constant dense<0.000000e+00> : vector<16x96xf32>
    %6 = tpu.matmul %4, %5, %cst {dimension_numbers = #tpu.dot_dimension_numbers<[1], [0], [0], [1], [0, 0, 1, 1], [], []>} : vector<16x32xbf16>, vector<32x96xbf16>, vector<16x96xf32> -> vector<16x96xf32>
    %7 = arith.addf %3, %6 : vector<16x96xf32>
    %c0_6 = arith.constant 0 : index
    %c0_7 = arith.constant 0 : index
    %8 = vector.load %arg7[%c0_6, %c0_7] : memref<16x96xf32, #tpu.memory_space<vmem>>, vector<16x96xf32>
    tpu.vector_store %arg7[%c0_6, %c0_7], %7 {strides = array<i32>} : memref<16x96xf32, #tpu.memory_space<vmem>>, vector<16x96xf32>,
    %c0_i32_8 = arith.constant 0 : i32
    %9 = arith.cmpi eq, %arg2, %c0_i32_8 : i32
    %10 = arith.extui %9 : i1 to i32
    %c0_i32_9 = arith.constant 0 : i32
    %11 = arith.cmpi ne, %10, %c0_i32_9 : i32
    scf.if %11 {
      %c0_10 = arith.constant 0 : index
      %c0_11 = arith.constant 0 : index
      %12 = vector.load %arg7[%c0_10, %c0_11] : memref<16x96xf32, #tpu.memory_space<vmem>>, vector<16x96xf32>
      %c0_12 = arith.constant 0 : index
      %c0_13 = arith.constant 0 : index
      %13 = vector.load %arg5[%c0_12, %c0_13] : memref<1x96xf32, #tpu.memory_space<vmem>>, vector<1x96xf32>
      %14 = vector.broadcast %13 : vector<1x96xf32> to vector<16x96xf32>
      %15 = arith.addf %12, %14 : vector<16x96xf32>
      %16 = arith.truncf %15 : vector<16x96xf32> to vector<16x96xbf16>
      %c0_14 = arith.constant 0 : index
      %c0_15 = arith.constant 0 : index
      %17 = vector.load %arg6[%c0_14, %c0_15] : memref<16x96xbf16, #tpu.memory_space<vmem>>, vector<16x96xbf16>
      tpu.vector_store %arg6[%c0_14, %c0_15], %16 {strides = array<i32>} : memref<16x96xbf16, #tpu.memory_space<vmem>>, vector<16x96xbf16>,
    } else {
    }
    return
  }
  func.func @transform_0(%arg0: i32, %arg1: i32, %arg2: i32) -> (i32, i32) {
    %c0_i32 = arith.constant 0 : i32
    return %arg0, %arg2 : i32, i32
  }
  func.func @transform_1(%arg0: i32, %arg1: i32, %arg2: i32) -> (i32, i32) {
    %c0_i32 = arith.constant 0 : i32
    return %arg2, %arg1 : i32, i32
  }
  func.func @transform_2(%arg0: i32, %arg1: i32, %arg2: i32) -> (i32, i32) {
    %c0_i32 = arith.constant 0 : i32
    %c0_i32_0 = arith.constant 0 : i32
    return %c0_i32, %arg1 : i32, i32
  }
  func.func @transform_3(%arg0: i32, %arg1: i32, %arg2: i32) -> (i32, i32) {
    %c0_i32 = arith.constant 0 : i32
    return %arg0, %arg1 : i32, i32
  }
}

module attributes {stable_mosaic.version = 11 : i64} {
  func.func @kernel(%arg0: i32, %arg1: memref<1x8x96xbf16, #tpu.memory_space<vmem>>, %arg2: memref<1x8x32xbf16, #tpu.memory_space<vmem>>, %arg3: memref<8x32xf32, #tpu.memory_space<vmem>>) attributes {dimension_semantics = [#tpu.dimension_semantics<parallel>], iteration_bounds = array<i64: 2>, scalar_prefetch = 0 : i64, scratch_operands = 1 : i64, tpu.core_type = #tpu.core_type<tc>, window_params = [{transform_indices = @transform_0, window_bounds = array<i64: 1, 8, 96>}, {transform_indices = @transform_1, window_bounds = array<i64: 1, 8, 32>}]} {
    %c0 = arith.constant 0 : index
    %c0_0 = arith.constant 0 : index
    %c0_1 = arith.constant 0 : index
    %0 = vector.load %arg1[%c0, %c0_0, %c0_1] : memref<1x8x96xbf16, #tpu.memory_space<vmem>>, vector<1x8x96xbf16>
    %1 = vector.shape_cast %0 : vector<1x8x96xbf16> to vector<8x96xbf16>
    %2 = vector.extract_strided_slice %1 {offsets = [0, 0], sizes = [8, 8], strides = [1, 1]} : vector<8x96xbf16> to vector<8x8xbf16>
    %3 = vector.extract_strided_slice %1 {offsets = [0, 32], sizes = [8, 8], strides = [1, 1]} : vector<8x96xbf16> to vector<8x8xbf16>
    %4 = vector.extract_strided_slice %1 {offsets = [0, 64], sizes = [8, 8], strides = [1, 1]} : vector<8x96xbf16> to vector<8x8xbf16>
    %cst = arith.constant dense<0.000000e+00> : vector<8x8xf32>
    %5 = tpu.matmul %2, %3, %cst {dimension_numbers = #tpu.dot_dimension_numbers<[1], [1], [0], [0], [0, 0, 1, 0], [], []>} : vector<8x8xbf16>, vector<8x8xbf16>, vector<8x8xf32> -> vector<8x8xf32>
    %cst_2 = arith.constant dense<0xFF800000> : vector<8xf32>
    %6 = vector.multi_reduction <maximumf>, %5, %cst_2 [1] : vector<8x8xf32> to vector<8xf32>
    %7 = vector.shape_cast %6 : vector<8xf32> to vector<8x1xf32>
    %8 = vector.broadcast %7 : vector<8x1xf32> to vector<8x8xf32>
    %9 = arith.subf %5, %8 : vector<8x8xf32>
    %10 = math.exp %9 : vector<8x8xf32>
    %cst_3 = arith.constant dense<0.000000e+00> : vector<8xf32>
    %11 = vector.multi_reduction <add>, %10, %cst_3 [1] : vector<8x8xf32> to vector<8xf32>
    %12 = vector.shape_cast %11 : vector<8xf32> to vector<8x1xf32>
    %13 = tpu.reciprocal %12 {approx = true} : vector<8x1xf32> -> vector<8x1xf32>
    %14 = vector.broadcast %13 : vector<8x1xf32> to vector<8x8xf32>
    %15 = arith.mulf %10, %14 : vector<8x8xf32>
    %16 = arith.truncf %15 : vector<8x8xf32> to vector<8x8xbf16>
    %cst_4 = arith.constant dense<0.000000e+00> : vector<8x8xf32>
    %17 = tpu.matmul %16, %4, %cst_4 {dimension_numbers = #tpu.dot_dimension_numbers<[1], [0], [0], [1], [0, 0, 1, 1], [], []>} : vector<8x8xbf16>, vector<8x8xbf16>, vector<8x8xf32> -> vector<8x8xf32>
    %c0_5 = arith.constant 0 : index
    %c0_6 = arith.constant 0 : index
    %18 = vector.load %arg3[%c0_5, %c0_6] : memref<8x32xf32, #tpu.memory_space<vmem>>, vector<8x8xf32>
    tpu.vector_store %arg3[%c0_5, %c0_6], %17 {strides = array<i32>} : memref<8x32xf32, #tpu.memory_space<vmem>>, vector<8x8xf32>,
    %19 = vector.extract_strided_slice %1 {offsets = [0, 8], sizes = [8, 8], strides = [1, 1]} : vector<8x96xbf16> to vector<8x8xbf16>
    %20 = vector.extract_strided_slice %1 {offsets = [0, 40], sizes = [8, 8], strides = [1, 1]} : vector<8x96xbf16> to vector<8x8xbf16>
    %21 = vector.extract_strided_slice %1 {offsets = [0, 72], sizes = [8, 8], strides = [1, 1]} : vector<8x96xbf16> to vector<8x8xbf16>
    %cst_7 = arith.constant dense<0.000000e+00> : vector<8x8xf32>
    %22 = tpu.matmul %19, %20, %cst_7 {dimension_numbers = #tpu.dot_dimension_numbers<[1], [1], [0], [0], [0, 0, 1, 0], [], []>} : vector<8x8xbf16>, vector<8x8xbf16>, vector<8x8xf32> -> vector<8x8xf32>
    %cst_8 = arith.constant dense<0xFF800000> : vector<8xf32>
    %23 = vector.multi_reduction <maximumf>, %22, %cst_8 [1] : vector<8x8xf32> to vector<8xf32>
    %24 = vector.shape_cast %23 : vector<8xf32> to vector<8x1xf32>
    %25 = vector.broadcast %24 : vector<8x1xf32> to vector<8x8xf32>
    %26 = arith.subf %22, %25 : vector<8x8xf32>
    %27 = math.exp %26 : vector<8x8xf32>
    %cst_9 = arith.constant dense<0.000000e+00> : vector<8xf32>
    %28 = vector.multi_reduction <add>, %27, %cst_9 [1] : vector<8x8xf32> to vector<8xf32>
    %29 = vector.shape_cast %28 : vector<8xf32> to vector<8x1xf32>
    %30 = tpu.reciprocal %29 {approx = true} : vector<8x1xf32> -> vector<8x1xf32>
    %31 = vector.broadcast %30 : vector<8x1xf32> to vector<8x8xf32>
    %32 = arith.mulf %27, %31 : vector<8x8xf32>
    %33 = arith.truncf %32 : vector<8x8xf32> to vector<8x8xbf16>
    %cst_10 = arith.constant dense<0.000000e+00> : vector<8x8xf32>
    %34 = tpu.matmul %33, %21, %cst_10 {dimension_numbers = #tpu.dot_dimension_numbers<[1], [0], [0], [1], [0, 0, 1, 1], [], []>} : vector<8x8xbf16>, vector<8x8xbf16>, vector<8x8xf32> -> vector<8x8xf32>
    %c0_11 = arith.constant 0 : index
    %c8 = arith.constant 8 : index
    %35 = vector.load %arg3[%c0_11, %c8] : memref<8x32xf32, #tpu.memory_space<vmem>>, vector<8x8xf32>
    tpu.vector_store %arg3[%c0_11, %c8], %34 {strides = array<i32>} : memref<8x32xf32, #tpu.memory_space<vmem>>, vector<8x8xf32>,
    %36 = vector.extract_strided_slice %1 {offsets = [0, 16], sizes = [8, 8], strides = [1, 1]} : vector<8x96xbf16> to vector<8x8xbf16>
    %37 = vector.extract_strided_slice %1 {offsets = [0, 48], sizes = [8, 8], strides = [1, 1]} : vector<8x96xbf16> to vector<8x8xbf16>
    %38 = vector.extract_strided_slice %1 {offsets = [0, 80], sizes = [8, 8], strides = [1, 1]} : vector<8x96xbf16> to vector<8x8xbf16>
    %cst_12 = arith.constant dense<0.000000e+00> : vector<8x8xf32>
    %39 = tpu.matmul %36, %37, %cst_12 {dimension_numbers = #tpu.dot_dimension_numbers<[1], [1], [0], [0], [0, 0, 1, 0], [], []>} : vector<8x8xbf16>, vector<8x8xbf16>, vector<8x8xf32> -> vector<8x8xf32>
    %cst_13 = arith.constant dense<0xFF800000> : vector<8xf32>
    %40 = vector.multi_reduction <maximumf>, %39, %cst_13 [1] : vector<8x8xf32> to vector<8xf32>
    %41 = vector.shape_cast %40 : vector<8xf32> to vector<8x1xf32>
    %42 = vector.broadcast %41 : vector<8x1xf32> to vector<8x8xf32>
    %43 = arith.subf %39, %42 : vector<8x8xf32>
    %44 = math.exp %43 : vector<8x8xf32>
    %cst_14 = arith.constant dense<0.000000e+00> : vector<8xf32>
    %45 = vector.multi_reduction <add>, %44, %cst_14 [1] : vector<8x8xf32> to vector<8xf32>
    %46 = vector.shape_cast %45 : vector<8xf32> to vector<8x1xf32>
    %47 = tpu.reciprocal %46 {approx = true} : vector<8x1xf32> -> vector<8x1xf32>
    %48 = vector.broadcast %47 : vector<8x1xf32> to vector<8x8xf32>
    %49 = arith.mulf %44, %48 : vector<8x8xf32>
    %50 = arith.truncf %49 : vector<8x8xf32> to vector<8x8xbf16>
    %cst_15 = arith.constant dense<0.000000e+00> : vector<8x8xf32>
    %51 = tpu.matmul %50, %38, %cst_15 {dimension_numbers = #tpu.dot_dimension_numbers<[1], [0], [0], [1], [0, 0, 1, 1], [], []>} : vector<8x8xbf16>, vector<8x8xbf16>, vector<8x8xf32> -> vector<8x8xf32>
    %c0_16 = arith.constant 0 : index
    %c16 = arith.constant 16 : index
    %52 = vector.load %arg3[%c0_16, %c16] : memref<8x32xf32, #tpu.memory_space<vmem>>, vector<8x8xf32>
    tpu.vector_store %arg3[%c0_16, %c16], %51 {strides = array<i32>} : memref<8x32xf32, #tpu.memory_space<vmem>>, vector<8x8xf32>,
    %53 = vector.extract_strided_slice %1 {offsets = [0, 24], sizes = [8, 8], strides = [1, 1]} : vector<8x96xbf16> to vector<8x8xbf16>
    %54 = vector.extract_strided_slice %1 {offsets = [0, 56], sizes = [8, 8], strides = [1, 1]} : vector<8x96xbf16> to vector<8x8xbf16>
    %55 = vector.extract_strided_slice %1 {offsets = [0, 88], sizes = [8, 8], strides = [1, 1]} : vector<8x96xbf16> to vector<8x8xbf16>
    %cst_17 = arith.constant dense<0.000000e+00> : vector<8x8xf32>
    %56 = tpu.matmul %53, %54, %cst_17 {dimension_numbers = #tpu.dot_dimension_numbers<[1], [1], [0], [0], [0, 0, 1, 0], [], []>} : vector<8x8xbf16>, vector<8x8xbf16>, vector<8x8xf32> -> vector<8x8xf32>
    %cst_18 = arith.constant dense<0xFF800000> : vector<8xf32>
    %57 = vector.multi_reduction <maximumf>, %56, %cst_18 [1] : vector<8x8xf32> to vector<8xf32>
    %58 = vector.shape_cast %57 : vector<8xf32> to vector<8x1xf32>
    %59 = vector.broadcast %58 : vector<8x1xf32> to vector<8x8xf32>
    %60 = arith.subf %56, %59 : vector<8x8xf32>
    %61 = math.exp %60 : vector<8x8xf32>
    %cst_19 = arith.constant dense<0.000000e+00> : vector<8xf32>
    %62 = vector.multi_reduction <add>, %61, %cst_19 [1] : vector<8x8xf32> to vector<8xf32>
    %63 = vector.shape_cast %62 : vector<8xf32> to vector<8x1xf32>
    %64 = tpu.reciprocal %63 {approx = true} : vector<8x1xf32> -> vector<8x1xf32>
    %65 = vector.broadcast %64 : vector<8x1xf32> to vector<8x8xf32>
    %66 = arith.mulf %61, %65 : vector<8x8xf32>
    %67 = arith.truncf %66 : vector<8x8xf32> to vector<8x8xbf16>
    %cst_20 = arith.constant dense<0.000000e+00> : vector<8x8xf32>
    %68 = tpu.matmul %67, %55, %cst_20 {dimension_numbers = #tpu.dot_dimension_numbers<[1], [0], [0], [1], [0, 0, 1, 1], [], []>} : vector<8x8xbf16>, vector<8x8xbf16>, vector<8x8xf32> -> vector<8x8xf32>
    %c0_21 = arith.constant 0 : index
    %c24 = arith.constant 24 : index
    %69 = vector.load %arg3[%c0_21, %c24] : memref<8x32xf32, #tpu.memory_space<vmem>>, vector<8x8xf32>
    tpu.vector_store %arg3[%c0_21, %c24], %68 {strides = array<i32>} : memref<8x32xf32, #tpu.memory_space<vmem>>, vector<8x8xf32>,
    %c0_22 = arith.constant 0 : index
    %c0_23 = arith.constant 0 : index
    %70 = vector.load %arg3[%c0_22, %c0_23] : memref<8x32xf32, #tpu.memory_space<vmem>>, vector<8x32xf32>
    %71 = arith.truncf %70 : vector<8x32xf32> to vector<8x32xbf16>
    %c0_24 = arith.constant 0 : index
    %c0_25 = arith.constant 0 : index
    %c0_26 = arith.constant 0 : index
    %72 = vector.load %arg2[%c0_24, %c0_25, %c0_26] : memref<1x8x32xbf16, #tpu.memory_space<vmem>>, vector<1x8x32xbf16>
    %73 = vector.shape_cast %72 : vector<1x8x32xbf16> to vector<8x32xbf16>
    %74 = vector.shape_cast %71 : vector<8x32xbf16> to vector<1x8x32xbf16>
    tpu.vector_store %arg2[%c0_24, %c0_25, %c0_26], %74 {strides = array<i32>} : memref<1x8x32xbf16, #tpu.memory_space<vmem>>, vector<1x8x32xbf16>,
    return
  }
  func.func @transform_0(%arg0: i32) -> (i32, i32, i32) {
    %c0_i32 = arith.constant 0 : i32
    %c0_i32_0 = arith.constant 0 : i32
    %c0_i32_1 = arith.constant 0 : i32
    return %arg0, %c0_i32, %c0_i32_0 : i32, i32, i32
  }
  func.func @transform_1(%arg0: i32) -> (i32, i32, i32) {
    %c0_i32 = arith.constant 0 : i32
    %c0_i32_0 = arith.constant 0 : i32
    %c0_i32_1 = arith.constant 0 : i32
    return %arg0, %c0_i32, %c0_i32_0 : i32, i32, i32
  }
}

module attributes {stable_mosaic.version = 11 : i64} {
  func.func @kernel(%arg0: i32, %arg1: i32, %arg2: memref<16x32xbf16, #tpu.memory_space<vmem>>, %arg3: memref<32x128xbf16, #tpu.memory_space<vmem>>, %arg4: memref<1x128xf32, #tpu.memory_space<vmem>>, %arg5: memref<128x32xbf16, #tpu.memory_space<vmem>>, %arg6: memref<1x32xf32, #tpu.memory_space<vmem>>, %arg7: memref<16x32xf32, #tpu.memory_space<vmem>>, %arg8: memref<1x32xf32, #tpu.memory_space<vmem>>, %arg9: memref<1x32xf32, #tpu.memory_space<vmem>>, %arg10: memref<16x32xf32, #tpu.memory_space<vmem>>, %arg11: memref<16x32xbf16, #tpu.memory_space<vmem>>, %arg12: memref<16x32xf32, #tpu.memory_space<vmem>>) attributes {dimension_semantics = [#tpu.dimension_semantics<parallel>, #tpu.dimension_semantics<arbitrary>], iteration_bounds = array<i64: 1, 1>, scalar_prefetch = 0 : i64, scratch_operands = 1 : i64, tpu.core_type = #tpu.core_type<tc>, window_params = [{transform_indices = @transform_0, window_bounds = array<i64: 16, 32>}, {transform_indices = @transform_1, window_bounds = array<i64: 32, 128>}, {transform_indices = @transform_2, window_bounds = array<i64: 1, 128>}, {transform_indices = @transform_3, window_bounds = array<i64: 128, 32>}, {pipeline_mode = #tpu.pipeline_mode<synchronous>, transform_indices = @transform_4, window_bounds = array<i64: 1, 32>}, {transform_indices = @transform_5, window_bounds = array<i64: 16, 32>}, {pipeline_mode = #tpu.pipeline_mode<synchronous>, transform_indices = @transform_6, window_bounds = array<i64: 1, 32>}, {pipeline_mode = #tpu.pipeline_mode<synchronous>, transform_indices = @transform_7, window_bounds = array<i64: 1, 32>}, {transform_indices = @transform_8, window_bounds = array<i64: 16, 32>}, {transform_indices = @transform_9, window_bounds = array<i64: 16, 32>}]} {
    %c0_i32 = arith.constant 0 : i32
    %0 = arith.cmpi eq, %arg1, %c0_i32 : i32
    %1 = arith.extui %0 : i1 to i32
    %c0_i32_0 = arith.constant 0 : i32
    %2 = arith.cmpi ne, %1, %c0_i32_0 : i32
    scf.if %2 {
      %cst_16 = arith.constant 0.000000e+00 : f32
      %20 = vector.broadcast %cst_16 : f32 to vector<16x32xf32>
      %c0_17 = arith.constant 0 : index
      %c0_18 = arith.constant 0 : index
      %21 = vector.load %arg12[%c0_17, %c0_18] : memref<16x32xf32, #tpu.memory_space<vmem>>, vector<16x32xf32>
      tpu.vector_store %arg12[%c0_17, %c0_18], %20 {strides = array<i32>} : memref<16x32xf32, #tpu.memory_space<vmem>>, vector<16x32xf32>,
    } else {
    }
    %c0 = arith.constant 0 : index
    %c0_1 = arith.constant 0 : index
    %3 = vector.load %arg2[%c0, %c0_1] : memref<16x32xbf16, #tpu.memory_space<vmem>>, vector<16x32xbf16>
    %c0_2 = arith.constant 0 : index
    %c0_3 = arith.constant 0 : index
    %4 = vector.load %arg3[%c0_2, %c0_3] : memref<32x128xbf16, #tpu.memory_space<vmem>>, vector<32x128xbf16>
    %cst = arith.constant dense<0.000000e+00> : vector<16x128xf32>
    %5 = tpu.matmul %3, %4, %cst {dimension_numbers = #tpu.dot_dimension_numbers<[1], [0], [0], [1], [0, 0, 1, 1], [], []>} : vector<16x32xbf16>, vector<32x128xbf16>, vector<16x128xf32> -> vector<16x128xf32>
    %c0_4 = arith.constant 0 : index
    %c0_5 = arith.constant 0 : index
    %6 = vector.load %arg4[%c0_4, %c0_5] : memref<1x128xf32, #tpu.memory_space<vmem>>, vector<1x128xf32>
    %7 = vector.broadcast %6 : vector<1x128xf32> to vector<16x128xf32>
    %8 = arith.addf %5, %7 : vector<16x128xf32>
    %cst_6 = arith.constant 0.000000e+00 : f32
    %9 = vector.broadcast %cst_6 : f32 to vector<16x128xf32>
    %10 = arith.maximumf %8, %9 : vector<16x128xf32>
    %c0_7 = arith.constant 0 : index
    %c0_8 = arith.constant 0 : index
    %11 = vector.load %arg12[%c0_7, %c0_8] : memref<16x32xf32, #tpu.memory_space<vmem>>, vector<16x32xf32>
    %12 = arith.truncf %10 : vector<16x128xf32> to vector<16x128xbf16>
    %c0_9 = arith.constant 0 : index
    %c0_10 = arith.constant 0 : index
    %13 = vector.load %arg5[%c0_9, %c0_10] : memref<128x32xbf16, #tpu.memory_space<vmem>>, vector<128x32xbf16>
    %cst_11 = arith.constant dense<0.000000e+00> : vector<16x32xf32>
    %14 = tpu.matmul %12, %13, %cst_11 {dimension_numbers = #tpu.dot_dimension_numbers<[1], [0], [0], [1], [0, 0, 1, 1], [], []>} : vector<16x128xbf16>, vector<128x32xbf16>, vector<16x32xf32> -> vector<16x32xf32>
    %15 = arith.addf %11, %14 : vector<16x32xf32>
    %c0_12 = arith.constant 0 : index
    %c0_13 = arith.constant 0 : index
    %16 = vector.load %arg12[%c0_12, %c0_13] : memref<16x32xf32, #tpu.memory_space<vmem>>, vector<16x32xf32>
    tpu.vector_store %arg12[%c0_12, %c0_13], %15 {strides = array<i32>} : memref<16x32xf32, #tpu.memory_space<vmem>>, vector<16x32xf32>,
    %c0_i32_14 = arith.constant 0 : i32
    %17 = arith.cmpi eq, %arg1, %c0_i32_14 : i32
    %18 = arith.extui %17 : i1 to i32
    %c0_i32_15 = arith.constant 0 : i32
    %19 = arith.cmpi ne, %18, %c0_i32_15 : i32
    scf.if %19 {
      %c0_16 = arith.constant 0 : index
      %c0_17 = arith.constant 0 : index
      %20 = vector.load %arg12[%c0_16, %c0_17] : memref<16x32xf32, #tpu.memory_space<vmem>>, vector<16x32xf32>
      %c0_18 = arith.constant 0 : index
      %c0_19 = arith.constant 0 : index
      %21 = vector.load %arg6[%c0_18, %c0_19] : memref<1x32xf32, #tpu.memory_space<vmem>>, vector<1x32xf32>
      %22 = vector.broadcast %21 : vector<1x32xf32> to vector<16x32xf32>
      %23 = arith.addf %20, %22 : vector<16x32xf32>
      %c0_20 = arith.constant 0 : index
      %c0_21 = arith.constant 0 : index
      %24 = vector.load %arg7[%c0_20, %c0_21] : memref<16x32xf32, #tpu.memory_space<vmem>>, vector<16x32xf32>
      %25 = arith.addf %23, %24 : vector<16x32xf32>
      %c0_22 = arith.constant 0 : index
      %c0_23 = arith.constant 0 : index
      %26 = vector.load %arg10[%c0_22, %c0_23] : memref<16x32xf32, #tpu.memory_space<vmem>>, vector<16x32xf32>
      tpu.vector_store %arg10[%c0_22, %c0_23], %25 {strides = array<i32>} : memref<16x32xf32, #tpu.memory_space<vmem>>, vector<16x32xf32>,
      %c0_24 = arith.constant 0 : index
      %c0_25 = arith.constant 0 : index
      %27 = vector.load %arg8[%c0_24, %c0_25] : memref<1x32xf32, #tpu.memory_space<vmem>>, vector<1x32xf32>
      %c0_26 = arith.constant 0 : index
      %c0_27 = arith.constant 0 : index
      %28 = vector.load %arg9[%c0_26, %c0_27] : memref<1x32xf32, #tpu.memory_space<vmem>>, vector<1x32xf32>
      %cst_28 = arith.constant dense<0.000000e+00> : vector<16xf32>
      %29 = vector.multi_reduction <add>, %25, %cst_28 [1] : vector<16x32xf32> to vector<16xf32>
      %30 = vector.shape_cast %29 : vector<16xf32> to vector<16x1xf32>
      %cst_29 = arith.constant 3.200000e+01 : f32
      %31 = vector.broadcast %cst_29 : f32 to vector<16x1xf32>
      %32 = arith.divf %30, %31 : vector<16x1xf32>
      %33 = vector.broadcast %32 : vector<16x1xf32> to vector<16x32xf32>
      %34 = arith.subf %25, %33 : vector<16x32xf32>
      %35 = arith.mulf %34, %34 : vector<16x32xf32>
      %cst_30 = arith.constant dense<0.000000e+00> : vector<16xf32>
      %36 = vector.multi_reduction <add>, %35, %cst_30 [1] : vector<16x32xf32> to vector<16xf32>
      %37 = vector.shape_cast %36 : vector<16xf32> to vector<16x1xf32>
      %cst_31 = arith.constant 3.100000e+01 : f32
      %38 = vector.broadcast %cst_31 : f32 to vector<16x1xf32>
      %39 = arith.divf %37, %38 : vector<16x1xf32>
      %40 = vector.broadcast %27 : vector<1x32xf32> to vector<16x32xf32>
      %41 = arith.mulf %40, %34 : vector<16x32xf32>
      %42 = math.sqrt %39 : vector<16x1xf32>
      %cst_32 = arith.constant 9.99999997E-7 : f32
      %43 = vector.broadcast %cst_32 : f32 to vector<16x1xf32>
      %44 = arith.addf %42, %43 : vector<16x1xf32>
      %45 = vector.broadcast %44 : vector<16x1xf32> to vector<16x32xf32>
      %46 = arith.divf %41, %45 : vector<16x32xf32>
      %47 = vector.broadcast %28 : vector<1x32xf32> to vector<16x32xf32>
      %48 = arith.addf %46, %47 : vector<16x32xf32>
      %49 = arith.truncf %48 : vector<16x32xf32> to vector<16x32xbf16>
      %c0_33 = arith.constant 0 : index
      %c0_34 = arith.constant 0 : index
      %50 = vector.load %arg11[%c0_33, %c0_34] : memref<16x32xbf16, #tpu.memory_space<vmem>>, vector<16x32xbf16>
      tpu.vector_store %arg11[%c0_33, %c0_34], %49 {strides = array<i32>} : memref<16x32xbf16, #tpu.memory_space<vmem>>, vector<16x32xbf16>,
    } else {
    }
    return
  }
  func.func @transform_0(%arg0: i32, %arg1: i32) -> (i32, i32) {
    %c0_i32 = arith.constant 0 : i32
    %c0_i32_0 = arith.constant 0 : i32
    return %arg0, %c0_i32 : i32, i32
  }
  func.func @transform_1(%arg0: i32, %arg1: i32) -> (i32, i32) {
    %c0_i32 = arith.constant 0 : i32
    %c0_i32_0 = arith.constant 0 : i32
    return %c0_i32, %arg1 : i32, i32
  }
  func.func @transform_2(%arg0: i32, %arg1: i32) -> (i32, i32) {
    %c0_i32 = arith.constant 0 : i32
    %c0_i32_0 = arith.constant 0 : i32
    return %c0_i32, %arg1 : i32, i32
  }
  func.func @transform_3(%arg0: i32, %arg1: i32) -> (i32, i32) {
    %c0_i32 = arith.constant 0 : i32
    %c0_i32_0 = arith.constant 0 : i32
    return %arg1, %c0_i32 : i32, i32
  }
  func.func @transform_4(%arg0: i32, %arg1: i32) -> (i32, i32) {
    %c0_i32 = arith.constant 0 : i32
    %c0_i32_0 = arith.constant 0 : i32
    %c0_i32_1 = arith.constant 0 : i32
    return %c0_i32, %c0_i32_0 : i32, i32
  }
  func.func @transform_5(%arg0: i32, %arg1: i32) -> (i32, i32) {
    %c0_i32 = arith.constant 0 : i32
    %c0_i32_0 = arith.constant 0 : i32
    return %arg0, %c0_i32 : i32, i32
  }
  func.func @transform_6(%arg0: i32, %arg1: i32) -> (i32, i32) {
    %c0_i32 = arith.constant 0 : i32
    %c0_i32_0 = arith.constant 0 : i32
    %c0_i32_1 = arith.constant 0 : i32
    return %c0_i32, %c0_i32_0 : i32, i32
  }
  func.func @transform_7(%arg0: i32, %arg1: i32) -> (i32, i32) {
    %c0_i32 = arith.constant 0 : i32
    %c0_i32_0 = arith.constant 0 : i32
    %c0_i32_1 = arith.constant 0 : i32
    return %c0_i32, %c0_i32_0 : i32, i32
  }
  func.func @transform_8(%arg0: i32, %arg1: i32) -> (i32, i32) {
    %c0_i32 = arith.constant 0 : i32
    %c0_i32_0 = arith.constant 0 : i32
    return %arg0, %c0_i32 : i32, i32
  }
  func.func @transform_9(%arg0: i32, %arg1: i32) -> (i32, i32) {
    %c0_i32 = arith.constant 0 : i32
    %c0_i32_0 = arith.constant 0 : i32
    return %arg0, %c0_i32 : i32, i32
  }
}

module attributes {stable_mosaic.version = 11 : i64} {
  func.func @kernel(%arg0: i32, %arg1: i32, %arg2: memref<16x32xbf16, #tpu.memory_space<vmem>>, %arg3: memref<32x128xbf16, #tpu.memory_space<vmem>>, %arg4: memref<1x128xf32, #tpu.memory_space<vmem>>, %arg5: memref<128x32xbf16, #tpu.memory_space<vmem>>, %arg6: memref<1x32xf32, #tpu.memory_space<vmem>>, %arg7: memref<16x32xf32, #tpu.memory_space<vmem>>, %arg8: memref<1x32xf32, #tpu.memory_space<vmem>>, %arg9: memref<1x32xf32, #tpu.memory_space<vmem>>, %arg10: memref<16x32xf32, #tpu.memory_space<vmem>>, %arg11: memref<16x32xf32, #tpu.memory_space<vmem>>, %arg12: memref<16x32xf32, #tpu.memory_space<vmem>>) attributes {dimension_semantics = [#tpu.dimension_semantics<parallel>, #tpu.dimension_semantics<arbitrary>], iteration_bounds = array<i64: 1, 1>, scalar_prefetch = 0 : i64, scratch_operands = 1 : i64, tpu.core_type = #tpu.core_type<tc>, window_params = [{transform_indices = @transform_0, window_bounds = array<i64: 16, 32>}, {transform_indices = @transform_1, window_bounds = array<i64: 32, 128>}, {transform_indices = @transform_2, window_bounds = array<i64: 1, 128>}, {transform_indices = @transform_3, window_bounds = array<i64: 128, 32>}, {pipeline_mode = #tpu.pipeline_mode<synchronous>, transform_indices = @transform_4, window_bounds = array<i64: 1, 32>}, {transform_indices = @transform_5, window_bounds = array<i64: 16, 32>}, {pipeline_mode = #tpu.pipeline_mode<synchronous>, transform_indices = @transform_6, window_bounds = array<i64: 1, 32>}, {pipeline_mode = #tpu.pipeline_mode<synchronous>, transform_indices = @transform_7, window_bounds = array<i64: 1, 32>}, {transform_indices = @transform_8, window_bounds = array<i64: 16, 32>}, {transform_indices = @transform_9, window_bounds = array<i64: 16, 32>}]} {
    %c0_i32 = arith.constant 0 : i32
    %0 = arith.cmpi eq, %arg1, %c0_i32 : i32
    %1 = arith.extui %0 : i1 to i32
    %c0_i32_0 = arith.constant 0 : i32
    %2 = arith.cmpi ne, %1, %c0_i32_0 : i32
    scf.if %2 {
      %cst_16 = arith.constant 0.000000e+00 : f32
      %20 = vector.broadcast %cst_16 : f32 to vector<16x32xf32>
      %c0_17 = arith.constant 0 : index
      %c0_18 = arith.constant 0 : index
      %21 = vector.load %arg12[%c0_17, %c0_18] : memref<16x32xf32, #tpu.memory_space<vmem>>, vector<16x32xf32>
      tpu.vector_store %arg12[%c0_17, %c0_18], %20 {strides = array<i32>} : memref<16x32xf32, #tpu.memory_space<vmem>>, vector<16x32xf32>,
    } else {
    }
    %c0 = arith.constant 0 : index
    %c0_1 = arith.constant 0 : index
    %3 = vector.load %arg2[%c0, %c0_1] : memref<16x32xbf16, #tpu.memory_space<vmem>>, vector<16x32xbf16>
    %c0_2 = arith.constant 0 : index
    %c0_3 = arith.constant 0 : index
    %4 = vector.load %arg3[%c0_2, %c0_3] : memref<32x128xbf16, #tpu.memory_space<vmem>>, vector<32x128xbf16>
    %cst = arith.constant dense<0.000000e+00> : vector<16x128xf32>
    %5 = tpu.matmul %3, %4, %cst {dimension_numbers = #tpu.dot_dimension_numbers<[1], [0], [0], [1], [0, 0, 1, 1], [], []>} : vector<16x32xbf16>, vector<32x128xbf16>, vector<16x128xf32> -> vector<16x128xf32>
    %c0_4 = arith.constant 0 : index
    %c0_5 = arith.constant 0 : index
    %6 = vector.load %arg4[%c0_4, %c0_5] : memref<1x128xf32, #tpu.memory_space<vmem>>, vector<1x128xf32>
    %7 = vector.broadcast %6 : vector<1x128xf32> to vector<16x128xf32>
    %8 = arith.addf %5, %7 : vector<16x128xf32>
    %cst_6 = arith.constant 0.000000e+00 : f32
    %9 = vector.broadcast %cst_6 : f32 to vector<16x128xf32>
    %10 = arith.maximumf %8, %9 : vector<16x128xf32>
    %c0_7 = arith.constant 0 : index
    %c0_8 = arith.constant 0 : index
    %11 = vector.load %arg12[%c0_7, %c0_8] : memref<16x32xf32, #tpu.memory_space<vmem>>, vector<16x32xf32>
    %12 = arith.truncf %10 : vector<16x128xf32> to vector<16x128xbf16>
    %c0_9 = arith.constant 0 : index
    %c0_10 = arith.constant 0 : index
    %13 = vector.load %arg5[%c0_9, %c0_10] : memref<128x32xbf16, #tpu.memory_space<vmem>>, vector<128x32xbf16>
    %cst_11 = arith.constant dense<0.000000e+00> : vector<16x32xf32>
    %14 = tpu.matmul %12, %13, %cst_11 {dimension_numbers = #tpu.dot_dimension_numbers<[1], [0], [0], [1], [0, 0, 1, 1], [], []>} : vector<16x128xbf16>, vector<128x32xbf16>, vector<16x32xf32> -> vector<16x32xf32>
    %15 = arith.addf %11, %14 : vector<16x32xf32>
    %c0_12 = arith.constant 0 : index
    %c0_13 = arith.constant 0 : index
    %16 = vector.load %arg12[%c0_12, %c0_13] : memref<16x32xf32, #tpu.memory_space<vmem>>, vector<16x32xf32>
    tpu.vector_store %arg12[%c0_12, %c0_13], %15 {strides = array<i32>} : memref<16x32xf32, #tpu.memory_space<vmem>>, vector<16x32xf32>,
    %c0_i32_14 = arith.constant 0 : i32
    %17 = arith.cmpi eq, %arg1, %c0_i32_14 : i32
    %18 = arith.extui %17 : i1 to i32
    %c0_i32_15 = arith.constant 0 : i32
    %19 = arith.cmpi ne, %18, %c0_i32_15 : i32
    scf.if %19 {
      %c0_16 = arith.constant 0 : index
      %c0_17 = arith.constant 0 : index
      %20 = vector.load %arg12[%c0_16, %c0_17] : memref<16x32xf32, #tpu.memory_space<vmem>>, vector<16x32xf32>
      %c0_18 = arith.constant 0 : index
      %c0_19 = arith.constant 0 : index
      %21 = vector.load %arg6[%c0_18, %c0_19] : memref<1x32xf32, #tpu.memory_space<vmem>>, vector<1x32xf32>
      %22 = vector.broadcast %21 : vector<1x32xf32> to vector<16x32xf32>
      %23 = arith.addf %20, %22 : vector<16x32xf32>
      %c0_20 = arith.constant 0 : index
      %c0_21 = arith.constant 0 : index
      %24 = vector.load %arg7[%c0_20, %c0_21] : memref<16x32xf32, #tpu.memory_space<vmem>>, vector<16x32xf32>
      %25 = arith.addf %23, %24 : vector<16x32xf32>
      %c0_22 = arith.constant 0 : index
      %c0_23 = arith.constant 0 : index
      %26 = vector.load %arg10[%c0_22, %c0_23] : memref<16x32xf32, #tpu.memory_space<vmem>>, vector<16x32xf32>
      tpu.vector_store %arg10[%c0_22, %c0_23], %25 {strides = array<i32>} : memref<16x32xf32, #tpu.memory_space<vmem>>, vector<16x32xf32>,
      %c0_24 = arith.constant 0 : index
      %c0_25 = arith.constant 0 : index
      %27 = vector.load %arg8[%c0_24, %c0_25] : memref<1x32xf32, #tpu.memory_space<vmem>>, vector<1x32xf32>
      %c0_26 = arith.constant 0 : index
      %c0_27 = arith.constant 0 : index
      %28 = vector.load %arg9[%c0_26, %c0_27] : memref<1x32xf32, #tpu.memory_space<vmem>>, vector<1x32xf32>
      %cst_28 = arith.constant dense<0.000000e+00> : vector<16xf32>
      %29 = vector.multi_reduction <add>, %25, %cst_28 [1] : vector<16x32xf32> to vector<16xf32>
      %30 = vector.shape_cast %29 : vector<16xf32> to vector<16x1xf32>
      %cst_29 = arith.constant 3.200000e+01 : f32
      %31 = vector.broadcast %cst_29 : f32 to vector<16x1xf32>
      %32 = arith.divf %30, %31 : vector<16x1xf32>
      %33 = vector.broadcast %32 : vector<16x1xf32> to vector<16x32xf32>
      %34 = arith.subf %25, %33 : vector<16x32xf32>
      %35 = arith.mulf %34, %34 : vector<16x32xf32>
      %cst_30 = arith.constant dense<0.000000e+00> : vector<16xf32>
      %36 = vector.multi_reduction <add>, %35, %cst_30 [1] : vector<16x32xf32> to vector<16xf32>
      %37 = vector.shape_cast %36 : vector<16xf32> to vector<16x1xf32>
      %cst_31 = arith.constant 3.100000e+01 : f32
      %38 = vector.broadcast %cst_31 : f32 to vector<16x1xf32>
      %39 = arith.divf %37, %38 : vector<16x1xf32>
      %40 = vector.broadcast %27 : vector<1x32xf32> to vector<16x32xf32>
      %41 = arith.mulf %40, %34 : vector<16x32xf32>
      %42 = math.sqrt %39 : vector<16x1xf32>
      %cst_32 = arith.constant 9.99999997E-7 : f32
      %43 = vector.broadcast %cst_32 : f32 to vector<16x1xf32>
      %44 = arith.addf %42, %43 : vector<16x1xf32>
      %45 = vector.broadcast %44 : vector<16x1xf32> to vector<16x32xf32>
      %46 = arith.divf %41, %45 : vector<16x32xf32>
      %47 = vector.broadcast %28 : vector<1x32xf32> to vector<16x32xf32>
      %48 = arith.addf %46, %47 : vector<16x32xf32>
      %c0_33 = arith.constant 0 : index
      %c0_34 = arith.constant 0 : index
      %49 = vector.load %arg11[%c0_33, %c0_34] : memref<16x32xf32, #tpu.memory_space<vmem>>, vector<16x32xf32>
      tpu.vector_store %arg11[%c0_33, %c0_34], %48 {strides = array<i32>} : memref<16x32xf32, #tpu.memory_space<vmem>>, vector<16x32xf32>,
    } else {
    }
    return
  }
  func.func @transform_0(%arg0: i32, %arg1: i32) -> (i32, i32) {
    %c0_i32 = arith.constant 0 : i32
    %c0_i32_0 = arith.constant 0 : i32
    return %arg0, %c0_i32 : i32, i32
  }
  func.func @transform_1(%arg0: i32, %arg1: i32) -> (i32, i32) {
    %c0_i32 = arith.constant 0 : i32
    %c0_i32_0 = arith.constant 0 : i32
    return %c0_i32, %arg1 : i32, i32
  }
  func.func @transform_2(%arg0: i32, %arg1: i32) -> (i32, i32) {
    %c0_i32 = arith.constant 0 : i32
    %c0_i32_0 = arith.constant 0 : i32
    return %c0_i32, %arg1 : i32, i32
  }
  func.func @transform_3(%arg0: i32, %arg1: i32) -> (i32, i32) {
    %c0_i32 = arith.constant 0 : i32
    %c0_i32_0 = arith.constant 0 : i32
    return %arg1, %c0_i32 : i32, i32
  }
  func.func @transform_4(%arg0: i32, %arg1: i32) -> (i32, i32) {
    %c0_i32 = arith.constant 0 : i32
    %c0_i32_0 = arith.constant 0 : i32
    %c0_i32_1 = arith.constant 0 : i32
    return %c0_i32, %c0_i32_0 : i32, i32
  }
  func.func @transform_5(%arg0: i32, %arg1: i32) -> (i32, i32) {
    %c0_i32 = arith.constant 0 : i32
    %c0_i32_0 = arith.constant 0 : i32
    return %arg0, %c0_i32 : i32, i32
  }
  func.func @transform_6(%arg0: i32, %arg1: i32) -> (i32, i32) {
    %c0_i32 = arith.constant 0 : i32
    %c0_i32_0 = arith.constant 0 : i32
    %c0_i32_1 = arith.constant 0 : i32
    return %c0_i32, %c0_i32_0 : i32, i32
  }
  func.func @transform_7(%arg0: i32, %arg1: i32) -> (i32, i32) {
    %c0_i32 = arith.constant 0 : i32
    %c0_i32_0 = arith.constant 0 : i32
    %c0_i32_1 = arith.constant 0 : i32
    return %c0_i32, %c0_i32_0 : i32, i32
  }
  func.func @transform_8(%arg0: i32, %arg1: i32) -> (i32, i32) {
    %c0_i32 = arith.constant 0 : i32
    %c0_i32_0 = arith.constant 0 : i32
    return %arg0, %c0_i32 : i32, i32
  }
  func.func @transform_9(%arg0: i32, %arg1: i32) -> (i32, i32) {
    %c0_i32 = arith.constant 0 : i32
    %c0_i32_0 = arith.constant 0 : i32
    return %arg0, %c0_i32 : i32, i32
  }
}

</mosaic_0001>

<llo_original>
// kernel: transformer_forward.9
$region0: #{transformer_forward.9}
  #allocation0 [shape = 'u32[]', space=smem, size = 0x4, offset = 0x4, fixed_abs, tag = 'smem constant byte address 0x4 - core index']
  #allocation1 [shape = 'u32[144,128]{1,0:T(1,128)}', space=vmem, size = 0x12000, scoped, tag = 'internal scratch']
  %s0 = inlined_call_operand.vmem [shape: f32[16,32], index: 0, kind: input, shape index: {}]
  %s1 = inlined_call_operand.vmem [shape: f32[1,32], index: 1, kind: input, shape index: {}]
  %s2 = inlined_call_operand.vmem [shape: f32[1,32], index: 2, kind: input, shape index: {}]
  %s3 = inlined_call_operand.vmem [shape: bf16[16,32], index: 3, kind: output, shape index: {}]
  %s4 = sld [smem:[#allocation0]]
  $region22: #{transformer_forward.9} parent=0
    _
  %s6 = ssub.s32 1, %s4
  %s7 = scalar_select 0, %s6, %s4
  // Predicated region
  $region2: #{transformer_forward.9} parent=0 // pred_check
    _
  $region3: #{transformer_forward.9} parent=0 // pred_check_branch
    %9 = sbr.rel (0) target = $region5
  $region4: #{transformer_forward.9} parent=0 // pred_region
    _
  $region5: #{transformer_forward.9} parent=0 // pred_fallthru
    _
  // Predicated region
  $region6: #{transformer_forward.9} parent=0 // pred_check
    _
  $region7: #{transformer_forward.9} parent=0 // pred_check_branch
    %11 = sbr.rel (0) target = $region9
  $region8: #{transformer_forward.9} parent=0 // pred_region
    _
  $region9: #{transformer_forward.9} parent=0 // pred_fallthru
    _
  // Predicated region
  $region10: #{transformer_forward.9} parent=0 // pred_check
    _
  $region11: #{transformer_forward.9} parent=0 // pred_check_branch
    %13 = sbr.rel (0) target = $region13
  $region12: #{transformer_forward.9} parent=0 // pred_region
    _
  $region13: #{transformer_forward.9} parent=0 // pred_fallthru
    _
  %v14 = vld [vmem:[%s0] sm:$0xff]
  %v15 = vld [vmem:[%s0 + $0x8] sm:$0xff]
  %v16 = vld [vmem:[%s1] sm:$0x1]
  %v17 = vld [vmem:[%s2] sm:$0x1]
  %vm18 = vcmask 261120
  %v19 = vsel %vm18, %v14, 0.0
  %20 = vadd.xlane.f32.xlu0 %v19
  %v21 = vpop.xlane.xlu0 %20
  %v22 = vsel %vm18, %v15, 0.0
  %23 = vadd.xlane.f32.xlu0 %v22
  %v24 = vpop.xlane.xlu0 %23
  %v25 = vrcp.pop 32.0
  %v26 = vmul.f32 %v21, %v25
  %v27 = vmul.f32 %v24, %v25
  %v28 = vsub.f32 %v14, %v26
  %v29 = vsub.f32 %v15, %v27
  %v30 = vmul.f32 %v28, %v28
  %v31 = vmul.f32 %v29, %v29
  %v32 = vsel %vm18, %v30, 0.0
  %33 = vadd.xlane.f32.xlu0 %v32
  %v34 = vpop.xlane.xlu0 %33
  %v35 = vsel %vm18, %v31, 0.0
  %36 = vadd.xlane.f32.xlu0 %v35
  %v37 = vpop.xlane.xlu0 %36
  %v38 = vrcp.pop 31.0
  %v39 = vmul.f32 %v34, %v38
  %v40 = vmul.f32 %v37, %v38
  %v42 = vlaneseq
  %v43 = vshrl.u32 %v42, 7
  %v44 = vsub.s32 0, %v43
  %v45 = vrot.slane %v16, %v44
  %v47 = vmul.f32 %v45, %v28
  %v48 = vmul.f32 %v45, %v29
  %v49 = vrsqrt.pop %v39
  %v50 = vmul.f32 %v39, %v49
  %vm51 = vcmp.eq.f32.partialorder %v39, inf
  %v52 = vsel %vm51, %v39, %v50
  %vm53 = vcmp.eq.f32.partialorder %v39, 0.0
  %v54 = vand.u32 %v39, 2147483648
  %v55 = vsel %vm53, %v54, %v52
  %v56 = vrsqrt.pop %v40
  %v57 = vmul.f32 %v40, %v56
  %vm58 = vcmp.eq.f32.partialorder %v40, inf
  %v59 = vsel %vm58, %v40, %v57
  %vm60 = vcmp.eq.f32.partialorder %v40, 0.0
  %v61 = vand.u32 %v40, 2147483648
  %v62 = vsel %vm60, %v61, %v59
  %v63 = vadd.f32 %v55, 1e-06
  %v64 = vadd.f32 %v62, 1e-06
  %v65 = vrcp.pop %v63
  %v66 = vmul.f32 %v47, %v65
  %v67 = vrcp.pop %v64
  %v68 = vmul.f32 %v48, %v67
  %v70 = vlaneseq
  %v71 = vshrl.u32 %v70, 7
  %v72 = vsub.s32 0, %v71
  %v73 = vrot.slane %v17, %v72
  %v75 = vadd.f32 %v66, %v73
  %v76 = vadd.f32 %v68, %v73
  %v77 = vpack.c.bf16 %v76, %v75
  %v79 = vunpack.c.l.b16 %v77
  %v80 = vunpack.c.h.b16 %v77
  %v81 = vpack.c.b16 %v79, %v79
  %v82 = vpack.c.b16 %v80, %v80
  %vm85 = vcmask 257024
  %86 = vst.msk [vmem:[%s3] sm:$0xf] %vm85, %v81
  %87 = vst.msk [vmem:[%s3 + $0x4] sm:$0xf] %vm85, %v82
  // Predicated region
  $region14: #{transformer_forward.9} parent=0 // pred_check
    _
  $region15: #{transformer_forward.9} parent=0 // pred_check_branch
    %89 = sbr.rel (0) target = $region17
  $region16: #{transformer_forward.9} parent=0 // pred_region
    _
  $region17: #{transformer_forward.9} parent=0 // pred_fallthru
    _
  // Predicated region
  $region18: #{transformer_forward.9} parent=0 // pred_check
    _
  $region19: #{transformer_forward.9} parent=0 // pred_check_branch
    %91 = sbr.rel (0) target = $region21
  $region20: #{transformer_forward.9} parent=0 // pred_region
    _
  $region21: #{transformer_forward.9} parent=0 // pred_fallthru
    _

// kernel: transformer_forward.12
$region0: #{transformer_forward.12}
  #allocation0 [shape = 'u32[]', space=smem, size = 0x4, offset = 0x4, fixed_abs, tag = 'smem constant byte address 0x4 - core index']
  #allocation1 [shape = 'u32[144,128]{1,0:T(1,128)}', space=vmem, size = 0x12000, scoped, tag = 'internal scratch']
  #allocation2 [shape = 'f32[16,32]{1,0:T(8,128)}', space=vmem, size = 0x2000, scoped, tag = 'scratch operand']
  %s0 = inlined_call_operand.vmem [shape: bf16[16,32], index: 0, kind: input, shape index: {}]
  %s1 = inlined_call_operand.vmem [shape: bf16[32,32], index: 1, kind: input, shape index: {}]
  %s2 = inlined_call_operand.vmem [shape: f32[1,32], index: 2, kind: input, shape index: {}]
  %s3 = inlined_call_operand.vmem [shape: f32[16,32], index: 3, kind: input, shape index: {}]
  %s4 = inlined_call_operand.vmem [shape: f32[1,32], index: 4, kind: input, shape index: {}]
  %s5 = inlined_call_operand.vmem [shape: f32[1,32], index: 5, kind: input, shape index: {}]
  %s6 = inlined_call_operand.vmem [shape: f32[16,32], index: 6, kind: output, shape index: {0}]
  %s7 = inlined_call_operand.vmem [shape: bf16[16,32], index: 7, kind: output, shape index: {1}]
  %8 = xla_tuple %s6, %s7
  %s9 = sld [smem:[#allocation0]]
  $region50: #{transformer_forward.12} parent=0
    _
  %s11 = ssub.s32 1, %s9
  %s12 = scalar_select 0, %s11, %s9
  // Predicated region
  $region2: #{transformer_forward.12} parent=0 // pred_check
    _
  $region3: #{transformer_forward.12} parent=0 // pred_check_branch
    %14 = sbr.rel (0) target = $region5
  $region4: #{transformer_forward.12} parent=0 // pred_region
    _
  $region5: #{transformer_forward.12} parent=0 // pred_fallthru
    _
  // Predicated region
  $region6: #{transformer_forward.12} parent=0 // pred_check
    _
  $region7: #{transformer_forward.12} parent=0 // pred_check_branch
    %16 = sbr.rel (0) target = $region9
  $region8: #{transformer_forward.12} parent=0 // pred_region
    _
  $region9: #{transformer_forward.12} parent=0 // pred_fallthru
    _
  // Predicated region
  $region10: #{transformer_forward.12} parent=0 // pred_check
    _
  $region11: #{transformer_forward.12} parent=0 // pred_check_branch
    %18 = sbr.rel (0) target = $region13
  $region12: #{transformer_forward.12} parent=0 // pred_region
    _
  $region13: #{transformer_forward.12} parent=0 // pred_fallthru
    _
  // Predicated region
  $region14: #{transformer_forward.12} parent=0 // pred_check
    _
  $region15: #{transformer_forward.12} parent=0 // pred_check_branch
    %20 = sbr.rel (0) target = $region17
  $region16: #{transformer_forward.12} parent=0 // pred_region
    _
  $region17: #{transformer_forward.12} parent=0 // pred_fallthru
    _
  // Predicated region
  $region18: #{transformer_forward.12} parent=0 // pred_check
    _
  $region19: #{transformer_forward.12} parent=0 // pred_check_branch
    %22 = sbr.rel (0) target = $region21
  $region20: #{transformer_forward.12} parent=0 // pred_region
    _
  $region21: #{transformer_forward.12} parent=0 // pred_fallthru
    _
  // Predicated region
  $region22: #{transformer_forward.12} parent=0 // pred_check
    _
  $region23: #{transformer_forward.12} parent=0 // pred_check_branch
    %24 = sbr.rel (0) target = $region25
  $region24: #{transformer_forward.12} parent=0 // pred_region
    _
  $region25: #{transformer_forward.12} parent=0 // pred_fallthru
    _
  %p26 = scmp.eq.s32.totalorder 0, 0
  // Predicated region
  $region26: #{transformer_forward.12} parent=0 // pred_check
    %p27 = pneg %p26
  $region27: #{transformer_forward.12} parent=0 // pred_check_branch
    %29 = sbr.rel (%p27) target = $region29
  $region28: #{transformer_forward.12} parent=0 // pred_region
    %vm30 = vcmask 261120
    %31 = vst.msk [vmem:[#allocation2] sm:$0xff] %vm30, 0.0
    %32 = vst.msk [vmem:[#allocation2 + $0x8] sm:$0xff] %vm30, 0.0
  $region29: #{transformer_forward.12} parent=0 // pred_fallthru
    _
  %v33 = vld [vmem:[#allocation2] sm:$0xff]
  %v34 = vld [vmem:[#allocation2 + $0x8] sm:$0xff]
  %v35 = vld [vmem:[%s0] sm:$0xf]
  %v36 = vld [vmem:[%s0 + $0x4] sm:$0xf]
  %v37 = vld [vmem:[%s1] sm:$0xf]
  %v38 = vld [vmem:[%s1 + $0x4] sm:$0xf]
  %v39 = vld [vmem:[%s1 + $0x8] sm:$0xf]
  %v40 = vld [vmem:[%s1 + $0xc] sm:$0xf]
  %v43 = vunpack.c.l.b16 %v35
  %v44 = vunpack.c.l.b16 %v36
  %v45 = vpack.c.b16 %v44, %v43
  %v50 = vunpack.c.l.b16 %v37
  %v51 = vunpack.c.l.b16 %v38
  %v52 = vunpack.c.l.b16 %v39
  %v53 = vunpack.c.l.b16 %v40
  %v54 = vpack.c.b16 %v51, %v50
  %v55 = vpack.c.b16 %v53, %v52
  %vm58 = vcmask 261120
  %v60 = vsel %vm58, %v45, 0
  %62 = vmatprep.subr.bf16.mxu0 0
  %63 = vmatpush1.bf16.msra.mxu0 0
  %64 = vmatprep.subr.bf16.mxu0 0
  %65 = vmatpush1.bf16.msra.mxu0 0
  %66 = vmatprep.subr.bf16.mxu0 0
  %67 = vmatpush1.bf16.msra.mxu0 0
  %68 = vmatprep.subr.bf16.mxu0 0
  %69 = vmatpush1.bf16.msra.mxu0 0
  %70 = vmatprep.subr.bf16.mxu0 0
  %71 = vmatpush1.bf16.msra.mxu0 0
  %72 = vmatprep.subr.bf16.mxu0 0
  %73 = vmatpush1.bf16.msra.mxu0 0
  %74 = vmatprep.subr.bf16.mxu0 0
  %75 = vmatpush1.bf16.msra.mxu0 %v55
  %76 = vmatprep.subr.bf16.mxu0 0
  %77 = vmatpush1.bf16.msra.mxu0 %v54
  %78 = vmatprep.subr.bf16.mxu0 0
  %79 = vmatpush2.bf16.msra.mxu0 0
  %80 = vmatprep.subr.bf16.mxu0 0
  %81 = vmatpush2.bf16.msra.mxu0 0
  %82 = vmatprep.subr.bf16.mxu0 0
  %83 = vmatpush2.bf16.msra.mxu0 0
  %84 = vmatprep.subr.bf16.mxu0 0
  %85 = vmatpush2.bf16.msra.mxu0 0
  %86 = vmatprep.subr.bf16.mxu0 0
  %87 = vmatpush2.bf16.msra.mxu0 0
  %88 = vmatprep.subr.bf16.mxu0 0
  %89 = vmatpush2.bf16.msra.mxu0 0
  %90 = vmatprep.subr.bf16.mxu0 0
  %91 = vmatpush2.bf16.msra.mxu0 0
  %92 = vmatprep.subr.bf16.mxu0 0
  %93 = vmatpush2.bf16.msra.mxu0 0
  %94 = vmatprep.mubr.bf16.mxu0 0
  %95 = vmatmul.mubr.bf16.gmra.mxu0 %v60
  %v96 = vpop.f32.mrf.mxu0
  %v97 = vadd.f32 0.0, %v96
  %v98 = vpop.f32.mrf.mxu0
  %v99 = vpop.f32.mrf.mxu0
  %v100 = vadd.f32 0.0, %v99
  %v101 = vpop.f32.mrf.mxu0
  %102 = vdwg.mxu0
  %v103 = vadd.f32 %v33, %v97
  %v104 = vadd.f32 %v34, %v100
  %105 = vst.msk [vmem:[#allocation2] sm:$0xff] %vm58, %v103
  %106 = vst.msk [vmem:[#allocation2 + $0x8] sm:$0xff] %vm58, %v104
  // Predicated region
  $region30: #{transformer_forward.12} parent=0 // pred_check
    %p107 = pneg %p26
  $region31: #{transformer_forward.12} parent=0 // pred_check_branch
    %109 = sbr.rel (%p107) target = $region33
  $region32: #{transformer_forward.12} parent=0 // pred_region
    %v110 = vld [vmem:[#allocation2] sm:$0xff]
    %v111 = vld [vmem:[#allocation2 + $0x8] sm:$0xff]
    %v112 = vld [vmem:[%s2] sm:$0x1]
    %v114 = vlaneseq
    %v115 = vshrl.u32 %v114, 7
    %v116 = vsub.s32 0, %v115
    %v117 = vrot.slane %v112, %v116
    %v119 = vadd.f32 %v110, %v117
    %v120 = vadd.f32 %v111, %v117
    %v121 = vld [vmem:[%s3] sm:$0xff]
    %v122 = vld [vmem:[%s3 + $0x8] sm:$0xff]
    %v123 = vadd.f32 %v119, %v121
    %v124 = vadd.f32 %v120, %v122
    %125 = vst.msk [vmem:[%s6] sm:$0xff] %vm58, %v123
    %126 = vst.msk [vmem:[%s6 + $0x8] sm:$0xff] %vm58, %v124
    %v127 = vld [vmem:[%s4] sm:$0x1]
    %v128 = vld [vmem:[%s5] sm:$0x1]
    %v129 = vsel %vm58, %v123, 0.0
    %130 = vadd.xlane.f32.xlu0 %v129
    %v131 = vpop.xlane.xlu0 %130
    %v132 = vsel %vm58, %v124, 0.0
    %133 = vadd.xlane.f32.xlu0 %v132
    %v134 = vpop.xlane.xlu0 %133
    %v135 = vrcp.pop 32.0
    %v136 = vmul.f32 %v131, %v135
    %v137 = vmul.f32 %v134, %v135
    %v138 = vsub.f32 %v123, %v136
    %v139 = vsub.f32 %v124, %v137
    %v140 = vmul.f32 %v138, %v138
    %v141 = vmul.f32 %v139, %v139
    %v142 = vsel %vm58, %v140, 0.0
    %143 = vadd.xlane.f32.xlu0 %v142
    %v144 = vpop.xlane.xlu0 %143
    %v145 = vsel %vm58, %v141, 0.0
    %146 = vadd.xlane.f32.xlu0 %v145
    %v147 = vpop.xlane.xlu0 %146
    %v148 = vrcp.pop 31.0
    %v149 = vmul.f32 %v144, %v148
    %v150 = vmul.f32 %v147, %v148
    %v152 = vlaneseq
    %v153 = vshrl.u32 %v152, 7
    %v154 = vsub.s32 0, %v153
    %v155 = vrot.slane %v127, %v154
    %v157 = vmul.f32 %v155, %v138
    %v158 = vmul.f32 %v155, %v139
    %v159 = vrsqrt.pop %v149
    %v160 = vmul.f32 %v149, %v159
    %vm161 = vcmp.eq.f32.partialorder %v149, inf
    %v162 = vsel %vm161, %v149, %v160
    %vm163 = vcmp.eq.f32.partialorder %v149, 0.0
    %v164 = vand.u32 %v149, 2147483648
    %v165 = vsel %vm163, %v164, %v162
    %v166 = vrsqrt.pop %v150
    %v167 = vmul.f32 %v150, %v166
    %vm168 = vcmp.eq.f32.partialorder %v150, inf
    %v169 = vsel %vm168, %v150, %v167
    %vm170 = vcmp.eq.f32.partialorder %v150, 0.0
    %v171 = vand.u32 %v150, 2147483648
    %v172 = vsel %vm170, %v171, %v169
    %v173 = vadd.f32 %v165, 1e-06
    %v174 = vadd.f32 %v172, 1e-06
    %v175 = vrcp.pop %v173
    %v176 = vmul.f32 %v157, %v175
    %v177 = vrcp.pop %v174
    %v178 = vmul.f32 %v158, %v177
    %v180 = vlaneseq
    %v181 = vshrl.u32 %v180, 7
    %v182 = vsub.s32 0, %v181
    %v183 = vrot.slane %v128, %v182
    %v185 = vadd.f32 %v176, %v183
    %v186 = vadd.f32 %v178, %v183
    %v187 = vpack.c.bf16 %v186, %v185
    %v189 = vunpack.c.l.b16 %v187
    %v190 = vunpack.c.h.b16 %v187
    %v191 = vpack.c.b16 %v189, %v189
    %v192 = vpack.c.b16 %v190, %v190
    %vm195 = vcmask 257024
    %196 = vst.msk [vmem:[%s7] sm:$0xf] %vm195, %v191
    %197 = vst.msk [vmem:[%s7 + $0x4] sm:$0xf] %vm195, %v192
  $region33: #{transformer_forward.12} parent=0 // pred_fallthru
    _
  // Predicated region
  $region34: #{transformer_forward.12} parent=0 // pred_check
    _
  $region35: #{transformer_forward.12} parent=0 // pred_check_branch
    %199 = sbr.rel (0) target = $region37
  $region36: #{transformer_forward.12} parent=0 // pred_region
    _
  $region37: #{transformer_forward.12} parent=0 // pred_fallthru
    _
  // Predicated region
  $region38: #{transformer_forward.12} parent=0 // pred_check
    _
  $region39: #{transformer_forward.12} parent=0 // pred_check_branch
    %201 = sbr.rel (0) target = $region41
  $region40: #{transformer_forward.12} parent=0 // pred_region
    _
  $region41: #{transformer_forward.12} parent=0 // pred_fallthru
    _
  // Predicated region
  $region42: #{transformer_forward.12} parent=0 // pred_check
    _
  $region43: #{transformer_forward.12} parent=0 // pred_check_branch
    %203 = sbr.rel (0) target = $region45
  $region44: #{transformer_forward.12} parent=0 // pred_region
    _
  $region45: #{transformer_forward.12} parent=0 // pred_fallthru
    _
  // Predicated region
  $region46: #{transformer_forward.12} parent=0 // pred_check
    _
  $region47: #{transformer_forward.12} parent=0 // pred_check_branch
    %205 = sbr.rel (0) target = $region49
  $region48: #{transformer_forward.12} parent=0 // pred_region
    _
  $region49: #{transformer_forward.12} parent=0 // pred_fallthru
    _

// kernel: transformer_forward.10
$region0: #{transformer_forward.10}
  #allocation0 [shape = 'u32[]', space=smem, size = 0x4, offset = 0x4, fixed_abs, tag = 'smem constant byte address 0x4 - core index']
  #allocation1 [shape = 'u32[144,128]{1,0:T(1,128)}', space=vmem, size = 0x12000, scoped, tag = 'internal scratch']
  #allocation2 [shape = 'f32[16,96]{1,0:T(8,128)}', space=vmem, size = 0x2000, scoped, tag = 'scratch operand']
  %s0 = inlined_call_operand.vmem [shape: bf16[16,32], index: 0, kind: input, shape index: {}]
  %s1 = inlined_call_operand.vmem [shape: bf16[32,96], index: 1, kind: input, shape index: {}]
  %s2 = inlined_call_operand.vmem [shape: f32[1,96], index: 2, kind: input, shape index: {}]
  %s3 = inlined_call_operand.vmem [shape: bf16[16,96], index: 3, kind: output, shape index: {}]
  %s4 = sld [smem:[#allocation0]]
  $region30: #{transformer_forward.10} parent=0
    _
  %s6 = ssub.s32 1, %s4
  %s7 = scalar_select 0, %s6, %s4
  // Predicated region
  $region2: #{transformer_forward.10} parent=0 // pred_check
    _
  $region3: #{transformer_forward.10} parent=0 // pred_check_branch
    %9 = sbr.rel (0) target = $region5
  $region4: #{transformer_forward.10} parent=0 // pred_region
    _
  $region5: #{transformer_forward.10} parent=0 // pred_fallthru
    _
  // Predicated region
  $region6: #{transformer_forward.10} parent=0 // pred_check
    _
  $region7: #{transformer_forward.10} parent=0 // pred_check_branch
    %11 = sbr.rel (0) target = $region9
  $region8: #{transformer_forward.10} parent=0 // pred_region
    _
  $region9: #{transformer_forward.10} parent=0 // pred_fallthru
    _
  // Predicated region
  $region10: #{transformer_forward.10} parent=0 // pred_check
    _
  $region11: #{transformer_forward.10} parent=0 // pred_check_branch
    %13 = sbr.rel (0) target = $region13
  $region12: #{transformer_forward.10} parent=0 // pred_region
    _
  $region13: #{transformer_forward.10} parent=0 // pred_fallthru
    _
  %p15 = scmp.eq.s32.totalorder 0, 0
  // Predicated region
  $region14: #{transformer_forward.10} parent=0 // pred_check
    %p16 = pneg %p15
  $region15: #{transformer_forward.10} parent=0 // pred_check_branch
    %18 = sbr.rel (%p16) target = $region17
  $region16: #{transformer_forward.10} parent=0 // pred_region
    %vm19 = vcmask 785408
    %20 = vst.msk [vmem:[#allocation2] sm:$0xff] %vm19, 0.0
    %21 = vst.msk [vmem:[#allocation2 + $0x8] sm:$0xff] %vm19, 0.0
  $region17: #{transformer_forward.10} parent=0 // pred_fallthru
    _
  %v22 = vld [vmem:[#allocation2] sm:$0xff]
  %v23 = vld [vmem:[#allocation2 + $0x8] sm:$0xff]
  %v24 = vld [vmem:[%s0] sm:$0xf]
  %v25 = vld [vmem:[%s0 + $0x4] sm:$0xf]
  %v26 = vld [vmem:[%s1] sm:$0xf]
  %v27 = vld [vmem:[%s1 + $0x4] sm:$0xf]
  %v28 = vld [vmem:[%s1 + $0x8] sm:$0xf]
  %v29 = vld [vmem:[%s1 + $0xc] sm:$0xf]
  %v32 = vunpack.c.l.b16 %v24
  %v33 = vunpack.c.l.b16 %v25
  %v34 = vpack.c.b16 %v33, %v32
  %v39 = vunpack.c.l.b16 %v26
  %v40 = vunpack.c.l.b16 %v27
  %v41 = vunpack.c.l.b16 %v28
  %v42 = vunpack.c.l.b16 %v29
  %v43 = vpack.c.b16 %v40, %v39
  %v44 = vpack.c.b16 %v42, %v41
  %vm47 = vcmask 261120
  %v49 = vsel %vm47, %v34, 0
  %51 = vmatprep.subr.bf16.mxu0 0
  %52 = vmatpush1.bf16.msra.mxu0 0
  %53 = vmatprep.subr.bf16.mxu0 0
  %54 = vmatpush1.bf16.msra.mxu0 0
  %55 = vmatprep.subr.bf16.mxu0 0
  %56 = vmatpush1.bf16.msra.mxu0 0
  %57 = vmatprep.subr.bf16.mxu0 0
  %58 = vmatpush1.bf16.msra.mxu0 0
  %59 = vmatprep.subr.bf16.mxu0 0
  %60 = vmatpush1.bf16.msra.mxu0 0
  %61 = vmatprep.subr.bf16.mxu0 0
  %62 = vmatpush1.bf16.msra.mxu0 0
  %63 = vmatprep.subr.bf16.mxu0 0
  %64 = vmatpush1.bf16.msra.mxu0 %v44
  %65 = vmatprep.subr.bf16.mxu0 0
  %66 = vmatpush1.bf16.msra.mxu0 %v43
  %67 = vmatprep.subr.bf16.mxu0 0
  %68 = vmatpush2.bf16.msra.mxu0 0
  %69 = vmatprep.subr.bf16.mxu0 0
  %70 = vmatpush2.bf16.msra.mxu0 0
  %71 = vmatprep.subr.bf16.mxu0 0
  %72 = vmatpush2.bf16.msra.mxu0 0
  %73 = vmatprep.subr.bf16.mxu0 0
  %74 = vmatpush2.bf16.msra.mxu0 0
  %75 = vmatprep.subr.bf16.mxu0 0
  %76 = vmatpush2.bf16.msra.mxu0 0
  %77 = vmatprep.subr.bf16.mxu0 0
  %78 = vmatpush2.bf16.msra.mxu0 0
  %79 = vmatprep.subr.bf16.mxu0 0
  %80 = vmatpush2.bf16.msra.mxu0 0
  %81 = vmatprep.subr.bf16.mxu0 0
  %82 = vmatpush2.bf16.msra.mxu0 0
  %83 = vmatprep.mubr.bf16.mxu0 0
  %84 = vmatmul.mubr.bf16.gmra.mxu0 %v49
  %v85 = vpop.f32.mrf.mxu0
  %v86 = vadd.f32 0.0, %v85
  %v87 = vpop.f32.mrf.mxu0
  %v88 = vpop.f32.mrf.mxu0
  %v89 = vadd.f32 0.0, %v88
  %v90 = vpop.f32.mrf.mxu0
  %91 = vdwg.mxu0
  %v92 = vadd.f32 %v22, %v86
  %v93 = vadd.f32 %v23, %v89
  %vm94 = vcmask 785408
  %95 = vst.msk [vmem:[#allocation2] sm:$0xff] %vm94, %v92
  %96 = vst.msk [vmem:[#allocation2 + $0x8] sm:$0xff] %vm94, %v93
  // Predicated region
  $region18: #{transformer_forward.10} parent=0 // pred_check
    %p97 = pneg %p15
  $region19: #{transformer_forward.10} parent=0 // pred_check_branch
    %99 = sbr.rel (%p97) target = $region21
  $region20: #{transformer_forward.10} parent=0 // pred_region
    %v100 = vld [vmem:[#allocation2] sm:$0xff]
    %v101 = vld [vmem:[#allocation2 + $0x8] sm:$0xff]
    %v102 = vld [vmem:[%s2] sm:$0x1]
    %v104 = vlaneseq
    %v105 = vshrl.u32 %v104, 7
    %v106 = vsub.s32 0, %v105
    %v107 = vrot.slane %v102, %v106
    %v109 = vadd.f32 %v100, %v107
    %v110 = vadd.f32 %v101, %v107
    %v111 = vpack.c.bf16 %v110, %v109
    %v113 = vunpack.c.l.b16 %v111
    %v114 = vunpack.c.h.b16 %v111
    %v115 = vpack.c.b16 %v113, %v113
    %v116 = vpack.c.b16 %v114, %v114
    %vm119 = vcmask 781312
    %120 = vst.msk [vmem:[%s3] sm:$0xf] %vm119, %v115
    %121 = vst.msk [vmem:[%s3 + $0x4] sm:$0xf] %vm119, %v116
  $region21: #{transformer_forward.10} parent=0 // pred_fallthru
    _
  // Predicated region
  $region22: #{transformer_forward.10} parent=0 // pred_check
    _
  $region23: #{transformer_forward.10} parent=0 // pred_check_branch
    %123 = sbr.rel (0) target = $region25
  $region24: #{transformer_forward.10} parent=0 // pred_region
    _
  $region25: #{transformer_forward.10} parent=0 // pred_fallthru
    _
  // Predicated region
  $region26: #{transformer_forward.10} parent=0 // pred_check
    _
  $region27: #{transformer_forward.10} parent=0 // pred_check_branch
    %125 = sbr.rel (0) target = $region29
  $region28: #{transformer_forward.10} parent=0 // pred_region
    _
  $region29: #{transformer_forward.10} parent=0 // pred_fallthru
    _

// kernel: transformer_forward.11
$region0: #{transformer_forward.11}
  #allocation0 [shape = 'u32[]', space=smem, size = 0x4, offset = 0x4, fixed_abs, tag = 'smem constant byte address 0x4 - core index']
  #allocation1 [shape = 'u32[144,128]{1,0:T(1,128)}', space=vmem, size = 0x12000, scoped, tag = 'internal scratch']
  #allocation2 [shape = 'f32[8,32]{1,0:T(8,128)}', space=vmem, size = 0x1000, scoped, tag = 'scratch operand']
  %s0 = inlined_call_operand.vmem [shape: bf16[2,8,96], index: 0, kind: input, shape index: {}]
  %s1 = inlined_call_operand.vmem [shape: bf16[2,8,32], index: 1, kind: output, shape index: {}]
  %s2 = sld [smem:[#allocation0]]
  $region37: #{transformer_forward.11} parent=0
    _
  %s4 = ssub.s32 1, %s2
  %s5 = scalar_select 0, %s4, %s2
  loop: start=0, step=1, limit=4
  $region2: #{transformer_forward.11} parent=0 // loop_pre_header
    _
  $region3: #{transformer_forward.11} parent=0 // loop_header
    %s7 = sphi 0, %s11
    %p8 = scmp.ge.s32.totalorder %s7, 4
    %s17 = sphi 0, %s19
    %s20 = sphi 0, %s17
    %s21 = sphi 0, %s20
    %s37 = sphi 0, %s21
    %s43 = sphi 0, %s45
    %s46 = sphi 0, %s43
    %s47 = sphi 0, %s46
    %s63 = sphi 0, %s47
  $region4: #{transformer_forward.11} parent=0 // loop_header_branch
    %10 = sbr.rel (%p8) target = $region8
  $region5: #{transformer_forward.11} parent=0 // loop_body
    %s12 = ssub.s32 %s7, 1
    %s13 = ssub.s32 %s7, 2
    %s14 = sadd.s32 %s7, 1
    %s15 = ssub.s32 %s7, %s14
    %p16 = scmp.eq.s32.totalorder %s15, 0
    %s18 = sadd.s32 %s17, 1
    %s19 = scalar_select %p16, %s17, %s18
    %p22 = pneg %p16
    %p23 = scmp.eq.s32.totalorder %s7, 1
    %p24 = por %p22, %p23
    %p25 = scmp.ne.s32.totalorder %s17, %s20
    %p26 = scmp.eq.s32.totalorder %s7, 0
    %p27 = por %p25, %p26
    %p28 = scmp.ne.s32.totalorder %s17, %s20
    %p29 = scmp.eq.s32.totalorder %s12, 1
    %p30 = por %p28, %p29
    %p31 = scmp.ne.s32.totalorder %s20, %s21
    %p32 = scmp.eq.s32.totalorder %s12, 0
    %p33 = por %p31, %p32
    %p34 = scmp.ne.s32.totalorder %s20, %s21
    %p35 = scmp.eq.s32.totalorder %s13, 1
    %p36 = por %p34, %p35
    %p38 = scmp.ne.s32.totalorder %s21, %s37
    %p39 = scmp.eq.s32.totalorder %s13, 0
    %p40 = por %p38, %p39
    %s41 = ssub.s32 %s7, %s14
    %p42 = scmp.eq.s32.totalorder %s41, 0
    %s44 = sadd.s32 %s43, 1
    %s45 = scalar_select %p42, %s43, %s44
    %p48 = pneg %p42
    %p49 = scmp.eq.s32.totalorder %s7, 1
    %p50 = por %p48, %p49
    %p51 = scmp.ne.s32.totalorder %s43, %s46
    %p52 = scmp.eq.s32.totalorder %s7, 0
    %p53 = por %p51, %p52
    %p54 = scmp.ne.s32.totalorder %s43, %s46
    %p55 = scmp.eq.s32.totalorder %s12, 1
    %p56 = por %p54, %p55
    %p57 = scmp.ne.s32.totalorder %s46, %s47
    %p58 = scmp.eq.s32.totalorder %s12, 0
    %p59 = por %p57, %p58
    %p60 = scmp.ne.s32.totalorder %s46, %s47
    %p61 = scmp.eq.s32.totalorder %s13, 1
    %p62 = por %p60, %p61
    %p64 = scmp.ne.s32.totalorder %s47, %s63
    %p65 = scmp.eq.s32.totalorder %s13, 0
    %p66 = por %p64, %p65
    %p67 = scmp.le.s32.totalorder 1, %s7
    %p68 = scmp.lt.s32.totalorder %s7, 3
    %p69 = pnand %p67, %p68
    %p70 = pneg %p69
    // Predicated region
    $region9: #{transformer_forward.11} parent=5 // pred_check
      _
    $region10: #{transformer_forward.11} parent=5 // pred_check_branch
      %72 = sbr.rel (%p69) target = $region12
    $region11: #{transformer_forward.11} parent=5 // pred_region
      %s73 = ssub.s32 %s7, 1
    $region12: #{transformer_forward.11} parent=5 // pred_fallthru
      _
    %p74 = scmp.lt.s32.totalorder %s7, 2
    // Predicated region
    $region13: #{transformer_forward.11} parent=5 // pred_check
      %p75 = pneg %p74
    $region14: #{transformer_forward.11} parent=5 // pred_check_branch
      %77 = sbr.rel (%p75) target = $region16
    $region15: #{transformer_forward.11} parent=5 // pred_region
      // Predicated region
      $region17: #{transformer_forward.11} parent=15 // pred_check
        %p78 = pneg %p27
      $region18: #{transformer_forward.11} parent=15 // pred_check_branch
        %80 = sbr.rel (%p78) target = $region20
      $region19: #{transformer_forward.11} parent=15 // pred_region
        %p81 = scmp.lt.s32.totalorder %s7, 1
        %s82 = scalar_select %p81, %s7, 1
        %s83 = smul.addr %s82, 4
        %s84 = scalar_lea.vmem %s0, %s83
      $region20: #{transformer_forward.11} parent=15 // pred_fallthru
        _
    $region16: #{transformer_forward.11} parent=5 // pred_fallthru
      _
    %p85 = scmp.le.s32.totalorder 1, %s7
    %p86 = scmp.lt.s32.totalorder %s7, 3
    %p87 = pnand %p85, %p86
    %p88 = pneg %p87
    // Predicated region
    $region21: #{transformer_forward.11} parent=5 // pred_check
      _
    $region22: #{transformer_forward.11} parent=5 // pred_check_branch
      %90 = sbr.rel (%p87) target = $region24
    $region23: #{transformer_forward.11} parent=5 // pred_region
      %s91 = ssub.s32 %s7, 1
      %p92 = scmp.lt.s32.totalorder %s12, 1
      %s93 = scalar_select %p92, %s12, 1
      %s94 = smul.addr %s93, 4
      %s95 = scalar_lea.vmem %s0, %s94
      %p96 = pneg %p33
      %p97 = pneg %p30
      %p98 = pneg %p59
      %p99 = pneg %p56
      %p100 = scmp.lt.s32.totalorder %s12, 1
      %s101 = scalar_select %p100, %s12, 1
      %s102 = smul.addr %s101, 4
      %s103 = scalar_lea.vmem %s1, %s102
      %p104 = scmp.lt.s32.totalorder %s12, 1
      %s105 = scalar_select %p104, %s12, 1
      %s106 = smul.addr %s105, 4
      %s107 = scalar_lea.vmem %s0, %s106
      %p108 = scmp.lt.s32.totalorder %s12, 1
      %s109 = scalar_select %p108, %s12, 1
      %s110 = smul.addr %s109, 4
      %s111 = scalar_lea.vmem %s1, %s110
      %v113 = vld [vmem:[%s107] sm:$0xf]
      %v115 = vunpack.c.l.b16 %v113
      %v116 = vpack.c.b16 %v115, %v115
      %117 = vrot.lane.b32.xlu0 %v116, 96
      %v118 = vpop.permute.xlu0 %117
      %vm119 = vcmask 64512
      %v121 = vsel %vm119, %v113, 0
      %v124 = vsel %vm119, %v118, 0
      %126 = vmatprep.subr.bf16.mxu0 0
      %127 = vmatpush1.bf16.xpose.msra.mxu0 0
      %128 = vmatprep.subr.bf16.mxu0 0
      %129 = vmatpush1.bf16.xpose.msra.mxu0 0
      %130 = vmatprep.subr.bf16.mxu0 0
      %131 = vmatpush1.bf16.xpose.msra.mxu0 0
      %132 = vmatprep.subr.bf16.mxu0 0
      %133 = vmatpush1.bf16.xpose.msra.mxu0 0
      %134 = vmatprep.subr.bf16.mxu0 0
      %135 = vmatpush1.bf16.xpose.msra.mxu0 0
      %136 = vmatprep.subr.bf16.mxu0 0
      %137 = vmatpush1.bf16.xpose.msra.mxu0 0
      %138 = vmatprep.subr.bf16.mxu0 0
      %139 = vmatpush1.bf16.xpose.msra.mxu0 0
      %140 = vmatprep.subr.bf16.mxu0 0
      %141 = vmatpush1.bf16.xpose.msra.mxu0 %v124
      %142 = vmatprep.subr.bf16.mxu0 0
      %143 = vmatpush2.bf16.xpose.msra.mxu0 0
      %144 = vmatprep.subr.bf16.mxu0 0
      %145 = vmatpush2.bf16.xpose.msra.mxu0 0
      %146 = vmatprep.subr.bf16.mxu0 0
      %147 = vmatpush2.bf16.xpose.msra.mxu0 0
      %148 = vmatprep.subr.bf16.mxu0 0
      %149 = vmatpush2.bf16.xpose.msra.mxu0 0
      %150 = vmatprep.subr.bf16.mxu0 0
      %151 = vmatpush2.bf16.xpose.msra.mxu0 0
      %152 = vmatprep.subr.bf16.mxu0 0
      %153 = vmatpush2.bf16.xpose.msra.mxu0 0
      %154 = vmatprep.subr.bf16.mxu0 0
      %155 = vmatpush2.bf16.xpose.msra.mxu0 0
      %156 = vmatprep.subr.bf16.mxu0 0
      %157 = vmatpush2.bf16.xpose.msra.mxu0 0
      %158 = vmatprep.mubr.bf16.mxu0 0
      %159 = vmatmul.mubr.bf16.gmra.mxu0 %v121
      %v160 = vpop.f32.mrf.mxu0
      %v161 = vadd.f32 0.0, %v160
      %v162 = vpop.f32.mrf.mxu0
      %v163 = vpop.f32.mrf.mxu0
      %v164 = vpop.f32.mrf.mxu0
      %165 = vdwg.mxu0
      %v166 = vsel %vm119, %v161, -inf
      %167 = vmax.xlane.f32.xlu0 %v166
      %v168 = vpop.xlane.xlu0 %167
      %v169 = vsub.f32 %v161, %v168
      %v170 = vmul.f32 %v169, 1.442695
      %v171 = vpow.pop %v170
      %v172 = vsel %vm119, %v171, 0.0
      %173 = vadd.xlane.f32.xlu0 %v172
      %v174 = vpop.xlane.xlu0 %173
      %v175 = vrcp.pop %v174
      %v176 = vmul.f32 %v171, %v175
      %v177 = vpack.c.bf16 %v176, %v176
      %178 = vrot.lane.b32.xlu0 %v116, 64
      %v179 = vpop.permute.xlu0 %178
      %v181 = vsel %vm119, %v177, 0
      %vm183 = vcmask 1043456
      %v185 = vsel %vm183, %v179, 0
      %187 = vmatprep.subr.bf16.mxu0 0
      %188 = vmatpush1.bf16.msra.mxu0 0
      %189 = vmatprep.subr.bf16.mxu0 0
      %190 = vmatpush1.bf16.msra.mxu0 0
      %191 = vmatprep.subr.bf16.mxu0 0
      %192 = vmatpush1.bf16.msra.mxu0 0
      %193 = vmatprep.subr.bf16.mxu0 0
      %194 = vmatpush1.bf16.msra.mxu0 0
      %195 = vmatprep.subr.bf16.mxu0 0
      %196 = vmatpush1.bf16.msra.mxu0 0
      %197 = vmatprep.subr.bf16.mxu0 0
      %198 = vmatpush1.bf16.msra.mxu0 0
      %199 = vmatprep.subr.bf16.mxu0 0
      %200 = vmatpush1.bf16.msra.mxu0 0
      %201 = vmatprep.subr.bf16.mxu0 0
      %202 = vmatpush1.bf16.msra.mxu0 %v185
      %203 = vmatprep.subr.bf16.mxu0 0
      %204 = vmatpush2.bf16.msra.mxu0 0
      %205 = vmatprep.subr.bf16.mxu0 0
      %206 = vmatpush2.bf16.msra.mxu0 0
      %207 = vmatprep.subr.bf16.mxu0 0
      %208 = vmatpush2.bf16.msra.mxu0 0
      %209 = vmatprep.subr.bf16.mxu0 0
      %210 = vmatpush2.bf16.msra.mxu0 0
      %211 = vmatprep.subr.bf16.mxu0 0
      %212 = vmatpush2.bf16.msra.mxu0 0
      %213 = vmatprep.subr.bf16.mxu0 0
      %214 = vmatpush2.bf16.msra.mxu0 0
      %215 = vmatprep.subr.bf16.mxu0 0
      %216 = vmatpush2.bf16.msra.mxu0 0
      %217 = vmatprep.subr.bf16.mxu0 0
      %218 = vmatpush2.bf16.msra.mxu0 0
      %219 = vmatprep.mubr.bf16.mxu0 0
      %220 = vmatmul.mubr.bf16.gmra.mxu0 %v181
      %v221 = vpop.f32.mrf.mxu0
      %v222 = vadd.f32 0.0, %v221
      %v223 = vpop.f32.mrf.mxu0
      %v224 = vpop.f32.mrf.mxu0
      %v225 = vpop.f32.mrf.mxu0
      %226 = vdwg.mxu0
      %227 = vst.msk [vmem:[#allocation2] sm:$0xff] %vm119, %v222
      %228 = vrot.lane.b32.xlu0 %v116, 120
      %v229 = vpop.permute.xlu0 %228
      %230 = vrot.lane.b32.xlu0 %v116, 88
      %v231 = vpop.permute.xlu0 %230
      %v233 = vsel %vm119, %v229, 0
      %v236 = vsel %vm119, %v231, 0
      %238 = vmatprep.subr.bf16.mxu0 0
      %239 = vmatpush1.bf16.xpose.msra.mxu0 0
      %240 = vmatprep.subr.bf16.mxu0 0
      %241 = vmatpush1.bf16.xpose.msra.mxu0 0
      %242 = vmatprep.subr.bf16.mxu0 0
      %243 = vmatpush1.bf16.xpose.msra.mxu0 0
      %244 = vmatprep.subr.bf16.mxu0 0
      %245 = vmatpush1.bf16.xpose.msra.mxu0 0
      %246 = vmatprep.subr.bf16.mxu0 0
      %247 = vmatpush1.bf16.xpose.msra.mxu0 0
      %248 = vmatprep.subr.bf16.mxu0 0
      %249 = vmatpush1.bf16.xpose.msra.mxu0 0
      %250 = vmatprep.subr.bf16.mxu0 0
      %251 = vmatpush1.bf16.xpose.msra.mxu0 0
      %252 = vmatprep.subr.bf16.mxu0 0
      %253 = vmatpush1.bf16.xpose.msra.mxu0 %v236
      %254 = vmatprep.subr.bf16.mxu0 0
      %255 = vmatpush2.bf16.xpose.msra.mxu0 0
      %256 = vmatprep.subr.bf16.mxu0 0
      %257 = vmatpush2.bf16.xpose.msra.mxu0 0
      %258 = vmatprep.subr.bf16.mxu0 0
      %259 = vmatpush2.bf16.xpose.msra.mxu0 0
      %260 = vmatprep.subr.bf16.mxu0 0
      %261 = vmatpush2.bf16.xpose.msra.mxu0 0
      %262 = vmatprep.subr.bf16.mxu0 0
      %263 = vmatpush2.bf16.xpose.msra.mxu0 0
      %264 = vmatprep.subr.bf16.mxu0 0
      %265 = vmatpush2.bf16.xpose.msra.mxu0 0
      %266 = vmatprep.subr.bf16.mxu0 0
      %267 = vmatpush2.bf16.xpose.msra.mxu0 0
      %268 = vmatprep.subr.bf16.mxu0 0
      %269 = vmatpush2.bf16.xpose.msra.mxu0 0
      %270 = vmatprep.mubr.bf16.mxu0 0
      %271 = vmatmul.mubr.bf16.gmra.mxu0 %v233
      %v272 = vpop.f32.mrf.mxu0
      %v273 = vadd.f32 0.0, %v272
      %v274 = vpop.f32.mrf.mxu0
      %v275 = vpop.f32.mrf.mxu0
      %v276 = vpop.f32.mrf.mxu0
      %277 = vdwg.mxu0
      %v278 = vsel %vm119, %v273, -inf
      %279 = vmax.xlane.f32.xlu0 %v278
      %v280 = vpop.xlane.xlu0 %279
      %v281 = vsub.f32 %v273, %v280
      %v282 = vmul.f32 %v281, 1.442695
      %v283 = vpow.pop %v282
      %v284 = vsel %vm119, %v283, 0.0
      %285 = vadd.xlane.f32.xlu0 %v284
      %v286 = vpop.xlane.xlu0 %285
      %v287 = vrcp.pop %v286
      %v288 = vmul.f32 %v283, %v287
      %v289 = vpack.c.bf16 %v288, %v288
      %290 = vrot.lane.b32.xlu0 %v116, 56
      %v291 = vpop.permute.xlu0 %290
      %v293 = vsel %vm119, %v289, 0
      %v296 = vsel %vm183, %v291, 0
      %298 = vmatprep.subr.bf16.mxu0 0
      %299 = vmatpush1.bf16.msra.mxu0 0
      %300 = vmatprep.subr.bf16.mxu0 0
      %301 = vmatpush1.bf16.msra.mxu0 0
      %302 = vmatprep.subr.bf16.mxu0 0
      %303 = vmatpush1.bf16.msra.mxu0 0
      %304 = vmatprep.subr.bf16.mxu0 0
      %305 = vmatpush1.bf16.msra.mxu0 0
      %306 = vmatprep.subr.bf16.mxu0 0
      %307 = vmatpush1.bf16.msra.mxu0 0
      %308 = vmatprep.subr.bf16.mxu0 0
      %309 = vmatpush1.bf16.msra.mxu0 0
      %310 = vmatprep.subr.bf16.mxu0 0
      %311 = vmatpush1.bf16.msra.mxu0 0
      %312 = vmatprep.subr.bf16.mxu0 0
      %313 = vmatpush1.bf16.msra.mxu0 %v296
      %314 = vmatprep.subr.bf16.mxu0 0
      %315 = vmatpush2.bf16.msra.mxu0 0
      %316 = vmatprep.subr.bf16.mxu0 0
      %317 = vmatpush2.bf16.msra.mxu0 0
      %318 = vmatprep.subr.bf16.mxu0 0
      %319 = vmatpush2.bf16.msra.mxu0 0
      %320 = vmatprep.subr.bf16.mxu0 0
      %321 = vmatpush2.bf16.msra.mxu0 0
      %322 = vmatprep.subr.bf16.mxu0 0
      %323 = vmatpush2.bf16.msra.mxu0 0
      %324 = vmatprep.subr.bf16.mxu0 0
      %325 = vmatpush2.bf16.msra.mxu0 0
      %326 = vmatprep.subr.bf16.mxu0 0
      %327 = vmatpush2.bf16.msra.mxu0 0
      %328 = vmatprep.subr.bf16.mxu0 0
      %329 = vmatpush2.bf16.msra.mxu0 0
      %330 = vmatprep.mubr.bf16.mxu0 0
      %331 = vmatmul.mubr.bf16.gmra.mxu0 %v293
      %v332 = vpop.f32.mrf.mxu0
      %v333 = vadd.f32 0.0, %v332
      %v334 = vpop.f32.mrf.mxu0
      %v335 = vpop.f32.mrf.mxu0
      %v336 = vpop.f32.mrf.mxu0
      %337 = vdwg.mxu0
      %339 = vrot.lane.b32.xlu0 %v333, 8
      %v340 = vpop.permute.xlu0 %339
      %vm342 = vcmask 130112
      %343 = vst.msk [vmem:[#allocation2] sm:$0xff] %vm342, %v340
      %344 = vrot.lane.b32.xlu0 %v116, 112
      %v345 = vpop.permute.xlu0 %344
      %346 = vrot.lane.b32.xlu0 %v116, 80
      %v347 = vpop.permute.xlu0 %346
      %v349 = vsel %vm119, %v345, 0
      %v352 = vsel %vm119, %v347, 0
      %354 = vmatprep.subr.bf16.mxu0 0
      %355 = vmatpush1.bf16.xpose.msra.mxu0 0
      %356 = vmatprep.subr.bf16.mxu0 0
      %357 = vmatpush1.bf16.xpose.msra.mxu0 0
      %358 = vmatprep.subr.bf16.mxu0 0
      %359 = vmatpush1.bf16.xpose.msra.mxu0 0
      %360 = vmatprep.subr.bf16.mxu0 0
      %361 = vmatpush1.bf16.xpose.msra.mxu0 0
      %362 = vmatprep.subr.bf16.mxu0 0
      %363 = vmatpush1.bf16.xpose.msra.mxu0 0
      %364 = vmatprep.subr.bf16.mxu0 0
      %365 = vmatpush1.bf16.xpose.msra.mxu0 0
      %366 = vmatprep.subr.bf16.mxu0 0
      %367 = vmatpush1.bf16.xpose.msra.mxu0 0
      %368 = vmatprep.subr.bf16.mxu0 0
      %369 = vmatpush1.bf16.xpose.msra.mxu0 %v352
      %370 = vmatprep.subr.bf16.mxu0 0
      %371 = vmatpush2.bf16.xpose.msra.mxu0 0
      %372 = vmatprep.subr.bf16.mxu0 0
      %373 = vmatpush2.bf16.xpose.msra.mxu0 0
      %374 = vmatprep.subr.bf16.mxu0 0
      %375 = vmatpush2.bf16.xpose.msra.mxu0 0
      %376 = vmatprep.subr.bf16.mxu0 0
      %377 = vmatpush2.bf16.xpose.msra.mxu0 0
      %378 = vmatprep.subr.bf16.mxu0 0
      %379 = vmatpush2.bf16.xpose.msra.mxu0 0
      %380 = vmatprep.subr.bf16.mxu0 0
      %381 = vmatpush2.bf16.xpose.msra.mxu0 0
      %382 = vmatprep.subr.bf16.mxu0 0
      %383 = vmatpush2.bf16.xpose.msra.mxu0 0
      %384 = vmatprep.subr.bf16.mxu0 0
      %385 = vmatpush2.bf16.xpose.msra.mxu0 0
      %386 = vmatprep.mubr.bf16.mxu0 0
      %387 = vmatmul.mubr.bf16.gmra.mxu0 %v349
      %v388 = vpop.f32.mrf.mxu0
      %v389 = vadd.f32 0.0, %v388
      %v390 = vpop.f32.mrf.mxu0
      %v391 = vpop.f32.mrf.mxu0
      %v392 = vpop.f32.mrf.mxu0
      %393 = vdwg.mxu0
      %v394 = vsel %vm119, %v389, -inf
      %395 = vmax.xlane.f32.xlu0 %v394
      %v396 = vpop.xlane.xlu0 %395
      %v397 = vsub.f32 %v389, %v396
      %v398 = vmul.f32 %v397, 1.442695
      %v399 = vpow.pop %v398
      %v400 = vsel %vm119, %v399, 0.0
      %401 = vadd.xlane.f32.xlu0 %v400
      %v402 = vpop.xlane.xlu0 %401
      %v403 = vrcp.pop %v402
      %v404 = vmul.f32 %v399, %v403
      %v405 = vpack.c.bf16 %v404, %v404
      %406 = vrot.lane.b32.xlu0 %v116, 48
      %v407 = vpop.permute.xlu0 %406
      %v409 = vsel %vm119, %v405, 0
      %v412 = vsel %vm183, %v407, 0
      %414 = vmatprep.subr.bf16.mxu0 0
      %415 = vmatpush1.bf16.msra.mxu0 0
      %416 = vmatprep.subr.bf16.mxu0 0
      %417 = vmatpush1.bf16.msra.mxu0 0
      %418 = vmatprep.subr.bf16.mxu0 0
      %419 = vmatpush1.bf16.msra.mxu0 0
      %420 = vmatprep.subr.bf16.mxu0 0
      %421 = vmatpush1.bf16.msra.mxu0 0
      %422 = vmatprep.subr.bf16.mxu0 0
      %423 = vmatpush1.bf16.msra.mxu0 0
      %424 = vmatprep.subr.bf16.mxu0 0
      %425 = vmatpush1.bf16.msra.mxu0 0
      %426 = vmatprep.subr.bf16.mxu0 0
      %427 = vmatpush1.bf16.msra.mxu0 0
      %428 = vmatprep.subr.bf16.mxu0 0
      %429 = vmatpush1.bf16.msra.mxu0 %v412
      %430 = vmatprep.subr.bf16.mxu0 0
      %431 = vmatpush2.bf16.msra.mxu0 0
      %432 = vmatprep.subr.bf16.mxu0 0
      %433 = vmatpush2.bf16.msra.mxu0 0
      %434 = vmatprep.subr.bf16.mxu0 0
      %435 = vmatpush2.bf16.msra.mxu0 0
      %436 = vmatprep.subr.bf16.mxu0 0
      %437 = vmatpush2.bf16.msra.mxu0 0
      %438 = vmatprep.subr.bf16.mxu0 0
      %439 = vmatpush2.bf16.msra.mxu0 0
      %440 = vmatprep.subr.bf16.mxu0 0
      %441 = vmatpush2.bf16.msra.mxu0 0
      %442 = vmatprep.subr.bf16.mxu0 0
      %443 = vmatpush2.bf16.msra.mxu0 0
      %444 = vmatprep.subr.bf16.mxu0 0
      %445 = vmatpush2.bf16.msra.mxu0 0
      %446 = vmatprep.mubr.bf16.mxu0 0
      %447 = vmatmul.mubr.bf16.gmra.mxu0 %v409
      %v448 = vpop.f32.mrf.mxu0
      %v449 = vadd.f32 0.0, %v448
      %v450 = vpop.f32.mrf.mxu0
      %v451 = vpop.f32.mrf.mxu0
      %v452 = vpop.f32.mrf.mxu0
      %453 = vdwg.mxu0
      %455 = vrot.lane.b32.xlu0 %v449, 16
      %v456 = vpop.permute.xlu0 %455
      %vm458 = vcmask 195712
      %459 = vst.msk [vmem:[#allocation2] sm:$0xff] %vm458, %v456
      %460 = vrot.lane.b32.xlu0 %v116, 104
      %v461 = vpop.permute.xlu0 %460
      %462 = vrot.lane.b32.xlu0 %v116, 72
      %v463 = vpop.permute.xlu0 %462
      %v465 = vsel %vm119, %v461, 0
      %v468 = vsel %vm119, %v463, 0
      %470 = vmatprep.subr.bf16.mxu0 0
      %471 = vmatpush1.bf16.xpose.msra.mxu0 0
      %472 = vmatprep.subr.bf16.mxu0 0
      %473 = vmatpush1.bf16.xpose.msra.mxu0 0
      %474 = vmatprep.subr.bf16.mxu0 0
      %475 = vmatpush1.bf16.xpose.msra.mxu0 0
      %476 = vmatprep.subr.bf16.mxu0 0
      %477 = vmatpush1.bf16.xpose.msra.mxu0 0
      %478 = vmatprep.subr.bf16.mxu0 0
      %479 = vmatpush1.bf16.xpose.msra.mxu0 0
      %480 = vmatprep.subr.bf16.mxu0 0
      %481 = vmatpush1.bf16.xpose.msra.mxu0 0
      %482 = vmatprep.subr.bf16.mxu0 0
      %483 = vmatpush1.bf16.xpose.msra.mxu0 0
      %484 = vmatprep.subr.bf16.mxu0 0
      %485 = vmatpush1.bf16.xpose.msra.mxu0 %v468
      %486 = vmatprep.subr.bf16.mxu0 0
      %487 = vmatpush2.bf16.xpose.msra.mxu0 0
      %488 = vmatprep.subr.bf16.mxu0 0
      %489 = vmatpush2.bf16.xpose.msra.mxu0 0
      %490 = vmatprep.subr.bf16.mxu0 0
      %491 = vmatpush2.bf16.xpose.msra.mxu0 0
      %492 = vmatprep.subr.bf16.mxu0 0
      %493 = vmatpush2.bf16.xpose.msra.mxu0 0
      %494 = vmatprep.subr.bf16.mxu0 0
      %495 = vmatpush2.bf16.xpose.msra.mxu0 0
      %496 = vmatprep.subr.bf16.mxu0 0
      %497 = vmatpush2.bf16.xpose.msra.mxu0 0
      %498 = vmatprep.subr.bf16.mxu0 0
      %499 = vmatpush2.bf16.xpose.msra.mxu0 0
      %500 = vmatprep.subr.bf16.mxu0 0
      %501 = vmatpush2.bf16.xpose.msra.mxu0 0
      %502 = vmatprep.mubr.bf16.mxu0 0
      %503 = vmatmul.mubr.bf16.gmra.mxu0 %v465
      %v504 = vpop.f32.mrf.mxu0
      %v505 = vadd.f32 0.0, %v504
      %v506 = vpop.f32.mrf.mxu0
      %v507 = vpop.f32.mrf.mxu0
      %v508 = vpop.f32.mrf.mxu0
      %509 = vdwg.mxu0
      %v510 = vsel %vm119, %v505, -inf
      %511 = vmax.xlane.f32.xlu0 %v510
      %v512 = vpop.xlane.xlu0 %511
      %v513 = vsub.f32 %v505, %v512
      %v514 = vmul.f32 %v513, 1.442695
      %v515 = vpow.pop %v514
      %v516 = vsel %vm119, %v515, 0.0
      %517 = vadd.xlane.f32.xlu0 %v516
      %v518 = vpop.xlane.xlu0 %517
      %v519 = vrcp.pop %v518
      %v520 = vmul.f32 %v515, %v519
      %v521 = vpack.c.bf16 %v520, %v520
      %522 = vrot.lane.b32.xlu0 %v116, 40
      %v523 = vpop.permute.xlu0 %522
      %v525 = vsel %vm119, %v521, 0
      %v528 = vsel %vm183, %v523, 0
      %530 = vmatprep.subr.bf16.mxu0 0
      %531 = vmatpush1.bf16.msra.mxu0 0
      %532 = vmatprep.subr.bf16.mxu0 0
      %533 = vmatpush1.bf16.msra.mxu0 0
      %534 = vmatprep.subr.bf16.mxu0 0
      %535 = vmatpush1.bf16.msra.mxu0 0
      %536 = vmatprep.subr.bf16.mxu0 0
      %537 = vmatpush1.bf16.msra.mxu0 0
      %538 = vmatprep.subr.bf16.mxu0 0
      %539 = vmatpush1.bf16.msra.mxu0 0
      %540 = vmatprep.subr.bf16.mxu0 0
      %541 = vmatpush1.bf16.msra.mxu0 0
      %542 = vmatprep.subr.bf16.mxu0 0
      %543 = vmatpush1.bf16.msra.mxu0 0
      %544 = vmatprep.subr.bf16.mxu0 0
      %545 = vmatpush1.bf16.msra.mxu0 %v528
      %546 = vmatprep.subr.bf16.mxu0 0
      %547 = vmatpush2.bf16.msra.mxu0 0
      %548 = vmatprep.subr.bf16.mxu0 0
      %549 = vmatpush2.bf16.msra.mxu0 0
      %550 = vmatprep.subr.bf16.mxu0 0
      %551 = vmatpush2.bf16.msra.mxu0 0
      %552 = vmatprep.subr.bf16.mxu0 0
      %553 = vmatpush2.bf16.msra.mxu0 0
      %554 = vmatprep.subr.bf16.mxu0 0
      %555 = vmatpush2.bf16.msra.mxu0 0
      %556 = vmatprep.subr.bf16.mxu0 0
      %557 = vmatpush2.bf16.msra.mxu0 0
      %558 = vmatprep.subr.bf16.mxu0 0
      %559 = vmatpush2.bf16.msra.mxu0 0
      %560 = vmatprep.subr.bf16.mxu0 0
      %561 = vmatpush2.bf16.msra.mxu0 0
      %562 = vmatprep.mubr.bf16.mxu0 0
      %563 = vmatmul.mubr.bf16.gmra.mxu0 %v525
      %v564 = vpop.f32.mrf.mxu0
      %v565 = vadd.f32 0.0, %v564
      %v566 = vpop.f32.mrf.mxu0
      %v567 = vpop.f32.mrf.mxu0
      %v568 = vpop.f32.mrf.mxu0
      %569 = vdwg.mxu0
      %571 = vrot.lane.b32.xlu0 %v565, 24
      %v572 = vpop.permute.xlu0 %571
      %vm574 = vcmask 261312
      %575 = vst.msk [vmem:[#allocation2] sm:$0xff] %vm574, %v572
      %v576 = vld [vmem:[#allocation2] sm:$0xff]
      %v577 = vpack.c.bf16 %v576, %v576
      %vm578 = vcmask 257024
      %579 = vst.msk [vmem:[%s111] sm:$0xf] %vm578, %v577
      %p580 = scmp.lt.s32.totalorder %s12, 1
      %s581 = scalar_select %p580, %s12, 1
      %s582 = smul.addr %s581, 4
      %s583 = scalar_lea.vmem %s1, %s582
      // Predicated region
      $region25: #{transformer_forward.11} parent=23 // pred_check
        %p584 = pneg %p56
      $region26: #{transformer_forward.11} parent=23 // pred_check_branch
        %586 = sbr.rel (%p584) target = $region28
      $region27: #{transformer_forward.11} parent=23 // pred_region
        _
      $region28: #{transformer_forward.11} parent=23 // pred_fallthru
        _
    $region24: #{transformer_forward.11} parent=5 // pred_fallthru
      _
    %p587 = scmp.le.s32.totalorder 2, %s7
    // Predicated region
    $region29: #{transformer_forward.11} parent=5 // pred_check
      %p588 = pneg %p587
    $region30: #{transformer_forward.11} parent=5 // pred_check_branch
      %590 = sbr.rel (%p588) target = $region32
    $region31: #{transformer_forward.11} parent=5 // pred_region
      %s591 = ssub.s32 %s7, 2
      // Predicated region
      $region33: #{transformer_forward.11} parent=31 // pred_check
        %p592 = pneg %p62
      $region34: #{transformer_forward.11} parent=31 // pred_check_branch
        %594 = sbr.rel (%p592) target = $region36
      $region35: #{transformer_forward.11} parent=31 // pred_region
        %p595 = scmp.lt.s32.totalorder %s13, 1
        %s596 = scalar_select %p595, %s13, 1
        %s597 = smul.addr %s596, 4
        %s598 = scalar_lea.vmem %s1, %s597
      $region36: #{transformer_forward.11} parent=31 // pred_fallthru
        _
    $region32: #{transformer_forward.11} parent=5 // pred_fallthru
      _
  $region6: #{transformer_forward.11} parent=0 // loop_footer
    %s11 = sadd.s32 1, %s7
  $region7: #{transformer_forward.11} parent=0 // loop_footer_branch
    %6 = sbr.rel target = $region3
  $region8: #{transformer_forward.11} parent=0 // loop_exit
    _

// kernel: transformer_forward.17
$region0: #{transformer_forward.17}
  #allocation0 [shape = 'u32[]', space=smem, size = 0x4, offset = 0x4, fixed_abs, tag = 'smem constant byte address 0x4 - core index']
  #allocation1 [shape = 'u32[144,128]{1,0:T(1,128)}', space=vmem, size = 0x12000, scoped, tag = 'internal scratch']
  #allocation2 [shape = 'f32[16,32]{1,0:T(8,128)}', space=vmem, size = 0x2000, scoped, tag = 'scratch operand']
  %s0 = inlined_call_operand.vmem [shape: bf16[16,32], index: 0, kind: input, shape index: {}]
  %s1 = inlined_call_operand.vmem [shape: bf16[32,128], index: 1, kind: input, shape index: {}]
  %s2 = inlined_call_operand.vmem [shape: f32[1,128], index: 2, kind: input, shape index: {}]
  %s3 = inlined_call_operand.vmem [shape: bf16[128,32], index: 3, kind: input, shape index: {}]
  %s4 = inlined_call_operand.vmem [shape: f32[1,32], index: 4, kind: input, shape index: {}]
  %s5 = inlined_call_operand.vmem [shape: f32[16,32], index: 5, kind: input, shape index: {}]
  %s6 = inlined_call_operand.vmem [shape: f32[1,32], index: 6, kind: input, shape index: {}]
  %s7 = inlined_call_operand.vmem [shape: f32[1,32], index: 7, kind: input, shape index: {}]
  %s8 = inlined_call_operand.hbm [shape: f32[16,32], index: 8, kind: output, shape index: {0}]
  %s9 = inlined_call_operand.hbm [shape: f32[16,32], index: 9, kind: output, shape index: {1}]
  %10 = xla_tuple %s8, %s9
  %s11 = sld [smem:[#allocation0]]
  $region58: #{transformer_forward.17} parent=0
    _
  %s13 = ssub.s32 1, %s11
  %s14 = scalar_select 0, %s13, %s11
  $region1: #{transformer_forward.17} parent=0
    #allocation3 [shape = 'u8[8192]{0}', space=vmem, size = 0x2000, scoped, tag = 'output window, operand 0, single buffered']
    #allocation4 [shape = 's32[1]{0}', space=sflag, size = 0x4, scoped, tag = 'scoped memory for transformer_forward.17']
    #allocation5 [shape = 'u8[8192]{0}', space=vmem, size = 0x2000, scoped, tag = 'output window, operand 1, single buffered']
    #allocation6 [shape = 's32[1]{0}', space=sflag, size = 0x4, scoped, tag = 'scoped memory for transformer_forward.17']
    %15 = vsyncpa [#allocation4], 0
    %16 = vsyncpa [#allocation6], 0
    // Predicated region
    $region2: #{transformer_forward.17} parent=1 // pred_check
      _
    $region3: #{transformer_forward.17} parent=1 // pred_check_branch
      %18 = sbr.rel (0) target = $region5
    $region4: #{transformer_forward.17} parent=1 // pred_region
      _
    $region5: #{transformer_forward.17} parent=1 // pred_fallthru
      _
    // Predicated region
    $region6: #{transformer_forward.17} parent=1 // pred_check
      _
    $region7: #{transformer_forward.17} parent=1 // pred_check_branch
      %20 = sbr.rel (0) target = $region9
    $region8: #{transformer_forward.17} parent=1 // pred_region
      _
    $region9: #{transformer_forward.17} parent=1 // pred_fallthru
      _
    // Predicated region
    $region10: #{transformer_forward.17} parent=1 // pred_check
      _
    $region11: #{transformer_forward.17} parent=1 // pred_check_branch
      %22 = sbr.rel (0) target = $region13
    $region12: #{transformer_forward.17} parent=1 // pred_region
      _
    $region13: #{transformer_forward.17} parent=1 // pred_fallthru
      _
    // Predicated region
    $region14: #{transformer_forward.17} parent=1 // pred_check
      _
    $region15: #{transformer_forward.17} parent=1 // pred_check_branch
      %24 = sbr.rel (0) target = $region17
    $region16: #{transformer_forward.17} parent=1 // pred_region
      _
    $region17: #{transformer_forward.17} parent=1 // pred_fallthru
      _
    // Predicated region
    $region18: #{transformer_forward.17} parent=1 // pred_check
      _
    $region19: #{transformer_forward.17} parent=1 // pred_check_branch
      %26 = sbr.rel (0) target = $region21
    $region20: #{transformer_forward.17} parent=1 // pred_region
      _
    $region21: #{transformer_forward.17} parent=1 // pred_fallthru
      _
    // Predicated region
    $region22: #{transformer_forward.17} parent=1 // pred_check
      _
    $region23: #{transformer_forward.17} parent=1 // pred_check_branch
      %28 = sbr.rel (0) target = $region25
    $region24: #{transformer_forward.17} parent=1 // pred_region
      _
    $region25: #{transformer_forward.17} parent=1 // pred_fallthru
      _
    // Predicated region
    $region26: #{transformer_forward.17} parent=1 // pred_check
      _
    $region27: #{transformer_forward.17} parent=1 // pred_check_branch
      %30 = sbr.rel (0) target = $region29
    $region28: #{transformer_forward.17} parent=1 // pred_region
      _
    $region29: #{transformer_forward.17} parent=1 // pred_fallthru
      _
    // Predicated region
    $region30: #{transformer_forward.17} parent=1 // pred_check
      _
    $region31: #{transformer_forward.17} parent=1 // pred_check_branch
      %32 = sbr.rel (0) target = $region33
    $region32: #{transformer_forward.17} parent=1 // pred_region
      _
    $region33: #{transformer_forward.17} parent=1 // pred_fallthru
      _
    %p34 = scmp.eq.s32.totalorder 0, 0
    // Predicated region
    $region34: #{transformer_forward.17} parent=1 // pred_check
      %p35 = pneg %p34
    $region35: #{transformer_forward.17} parent=1 // pred_check_branch
      %37 = sbr.rel (%p35) target = $region37
    $region36: #{transformer_forward.17} parent=1 // pred_region
      %vm38 = vcmask 261120
      %39 = vst.msk [vmem:[#allocation2] sm:$0xff] %vm38, 0.0
      %40 = vst.msk [vmem:[#allocation2 + $0x8] sm:$0xff] %vm38, 0.0
    $region37: #{transformer_forward.17} parent=1 // pred_fallthru
      _
    %v41 = vld [vmem:[%s0] sm:$0xf]
    %v42 = vld [vmem:[%s0 + $0x4] sm:$0xf]
    %v43 = vld [vmem:[%s1] sm:$0xf]
    %v44 = vld [vmem:[%s1 + $0x4] sm:$0xf]
    %v45 = vld [vmem:[%s1 + $0x8] sm:$0xf]
    %v46 = vld [vmem:[%s1 + $0xc] sm:$0xf]
    %v47 = vld [vmem:[%s2] sm:$0x1]
    %v49 = vlaneseq
    %v50 = vshrl.u32 %v49, 7
    %v51 = vsub.s32 0, %v50
    %v52 = vrot.slane %v47, %v51
    %v56 = vunpack.c.l.b16 %v41
    %v57 = vunpack.c.l.b16 %v42
    %v58 = vpack.c.b16 %v57, %v56
    %v63 = vunpack.c.l.b16 %v43
    %v64 = vunpack.c.l.b16 %v44
    %v65 = vunpack.c.l.b16 %v45
    %v66 = vunpack.c.l.b16 %v46
    %v67 = vpack.c.b16 %v64, %v63
    %v68 = vpack.c.b16 %v66, %v65
    %vm71 = vcmask 261120
    %v73 = vsel %vm71, %v58, 0
    %75 = vmatprep.subr.bf16.mxu0 0
    %76 = vmatpush1.bf16.msra.mxu0 0
    %77 = vmatprep.subr.bf16.mxu0 0
    %78 = vmatpush1.bf16.msra.mxu0 0
    %79 = vmatprep.subr.bf16.mxu0 0
    %80 = vmatpush1.bf16.msra.mxu0 0
    %81 = vmatprep.subr.bf16.mxu0 0
    %82 = vmatpush1.bf16.msra.mxu0 0
    %83 = vmatprep.subr.bf16.mxu0 0
    %84 = vmatpush1.bf16.msra.mxu0 0
    %85 = vmatprep.subr.bf16.mxu0 0
    %86 = vmatpush1.bf16.msra.mxu0 0
    %87 = vmatprep.subr.bf16.mxu0 0
    %88 = vmatpush1.bf16.msra.mxu0 %v68
    %89 = vmatprep.subr.bf16.mxu0 0
    %90 = vmatpush1.bf16.msra.mxu0 %v67
    %91 = vmatprep.subr.bf16.mxu0 0
    %92 = vmatpush2.bf16.msra.mxu0 0
    %93 = vmatprep.subr.bf16.mxu0 0
    %94 = vmatpush2.bf16.msra.mxu0 0
    %95 = vmatprep.subr.bf16.mxu0 0
    %96 = vmatpush2.bf16.msra.mxu0 0
    %97 = vmatprep.subr.bf16.mxu0 0
    %98 = vmatpush2.bf16.msra.mxu0 0
    %99 = vmatprep.subr.bf16.mxu0 0
    %100 = vmatpush2.bf16.msra.mxu0 0
    %101 = vmatprep.subr.bf16.mxu0 0
    %102 = vmatpush2.bf16.msra.mxu0 0
    %103 = vmatprep.subr.bf16.mxu0 0
    %104 = vmatpush2.bf16.msra.mxu0 0
    %105 = vmatprep.subr.bf16.mxu0 0
    %106 = vmatpush2.bf16.msra.mxu0 0
    %107 = vmatprep.mubr.bf16.mxu0 0
    %108 = vmatmul.mubr.bf16.gmra.mxu0 %v73
    %v109 = vpop.f32.mrf.mxu0
    %v110 = vadd.f32 %v52, %v109
    %v111 = vpop.f32.mrf.mxu0
    %v112 = vpop.f32.mrf.mxu0
    %v113 = vadd.f32 %v52, %v112
    %v114 = vpop.f32.mrf.mxu0
    %115 = vdwg.mxu0
    %v116 = vmax.f32 %v110, 0.0
    %v117 = vmax.f32 %v113, 0.0
    %v118 = vld [vmem:[#allocation2] sm:$0xff]
    %v119 = vld [vmem:[#allocation2 + $0x8] sm:$0xff]
    %v120 = vpack.c.bf16 %v117, %v116
    %v121 = vld [vmem:[%s3] sm:$0xf]
    %v122 = vld [vmem:[%s3 + $0x4] sm:$0xf]
    %v123 = vld [vmem:[%s3 + $0x8] sm:$0xf]
    %v124 = vld [vmem:[%s3 + $0xc] sm:$0xf]
    %v125 = vld [vmem:[%s3 + $0x10] sm:$0xf]
    %v126 = vld [vmem:[%s3 + $0x14] sm:$0xf]
    %v127 = vld [vmem:[%s3 + $0x18] sm:$0xf]
    %v128 = vld [vmem:[%s3 + $0x1c] sm:$0xf]
    %v129 = vld [vmem:[%s3 + $0x20] sm:$0xf]
    %v130 = vld [vmem:[%s3 + $0x24] sm:$0xf]
    %v131 = vld [vmem:[%s3 + $0x28] sm:$0xf]
    %v132 = vld [vmem:[%s3 + $0x2c] sm:$0xf]
    %v133 = vld [vmem:[%s3 + $0x30] sm:$0xf]
    %v134 = vld [vmem:[%s3 + $0x34] sm:$0xf]
    %v135 = vld [vmem:[%s3 + $0x38] sm:$0xf]
    %v136 = vld [vmem:[%s3 + $0x3c] sm:$0xf]
    %v153 = vunpack.c.l.b16 %v121
    %v154 = vunpack.c.l.b16 %v122
    %v155 = vunpack.c.l.b16 %v123
    %v156 = vunpack.c.l.b16 %v124
    %v157 = vunpack.c.l.b16 %v125
    %v158 = vunpack.c.l.b16 %v126
    %v159 = vunpack.c.l.b16 %v127
    %v160 = vunpack.c.l.b16 %v128
    %v161 = vunpack.c.l.b16 %v129
    %v162 = vunpack.c.l.b16 %v130
    %v163 = vunpack.c.l.b16 %v131
    %v164 = vunpack.c.l.b16 %v132
    %v165 = vunpack.c.l.b16 %v133
    %v166 = vunpack.c.l.b16 %v134
    %v167 = vunpack.c.l.b16 %v135
    %v168 = vunpack.c.l.b16 %v136
    %v169 = vpack.c.b16 %v154, %v153
    %v170 = vpack.c.b16 %v156, %v155
    %v171 = vpack.c.b16 %v158, %v157
    %v172 = vpack.c.b16 %v160, %v159
    %v173 = vpack.c.b16 %v162, %v161
    %v174 = vpack.c.b16 %v164, %v163
    %v175 = vpack.c.b16 %v166, %v165
    %v176 = vpack.c.b16 %v168, %v167
    %185 = vmatprep.subr.bf16.mxu0 0
    %186 = vmatpush1.bf16.msra.mxu0 %v176
    %187 = vmatprep.subr.bf16.mxu0 0
    %188 = vmatpush1.bf16.msra.mxu0 %v175
    %189 = vmatprep.subr.bf16.mxu0 0
    %190 = vmatpush1.bf16.msra.mxu0 %v174
    %191 = vmatprep.subr.bf16.mxu0 0
    %192 = vmatpush1.bf16.msra.mxu0 %v173
    %193 = vmatprep.subr.bf16.mxu0 0
    %194 = vmatpush1.bf16.msra.mxu0 %v172
    %195 = vmatprep.subr.bf16.mxu0 0
    %196 = vmatpush1.bf16.msra.mxu0 %v171
    %197 = vmatprep.subr.bf16.mxu0 0
    %198 = vmatpush1.bf16.msra.mxu0 %v170
    %199 = vmatprep.subr.bf16.mxu0 0
    %200 = vmatpush1.bf16.msra.mxu0 %v169
    %201 = vmatprep.subr.bf16.mxu0 0
    %202 = vmatpush2.bf16.msra.mxu0 0
    %203 = vmatprep.subr.bf16.mxu0 0
    %204 = vmatpush2.bf16.msra.mxu0 0
    %205 = vmatprep.subr.bf16.mxu0 0
    %206 = vmatpush2.bf16.msra.mxu0 0
    %207 = vmatprep.subr.bf16.mxu0 0
    %208 = vmatpush2.bf16.msra.mxu0 0
    %209 = vmatprep.subr.bf16.mxu0 0
    %210 = vmatpush2.bf16.msra.mxu0 0
    %211 = vmatprep.subr.bf16.mxu0 0
    %212 = vmatpush2.bf16.msra.mxu0 0
    %213 = vmatprep.subr.bf16.mxu0 0
    %214 = vmatpush2.bf16.msra.mxu0 0
    %215 = vmatprep.subr.bf16.mxu0 0
    %216 = vmatpush2.bf16.msra.mxu0 0
    %217 = vmatprep.mubr.bf16.mxu0 0
    %218 = vmatmul.mubr.bf16.gmra.mxu0 %v120
    %v219 = vpop.f32.mrf.mxu0
    %v220 = vadd.f32 0.0, %v219
    %v221 = vpop.f32.mrf.mxu0
    %v222 = vpop.f32.mrf.mxu0
    %v223 = vadd.f32 0.0, %v222
    %v224 = vpop.f32.mrf.mxu0
    %225 = vdwg.mxu0
    %v226 = vadd.f32 %v118, %v220
    %v227 = vadd.f32 %v119, %v223
    %228 = vst.msk [vmem:[#allocation2] sm:$0xff] %vm71, %v226
    %229 = vst.msk [vmem:[#allocation2 + $0x8] sm:$0xff] %vm71, %v227
    // Predicated region
    $region38: #{transformer_forward.17} parent=1 // pred_check
      %p230 = pneg %p34
    $region39: #{transformer_forward.17} parent=1 // pred_check_branch
      %232 = sbr.rel (%p230) target = $region41
    $region40: #{transformer_forward.17} parent=1 // pred_region
      %v233 = vld [vmem:[#allocation2] sm:$0xff]
      %v234 = vld [vmem:[#allocation2 + $0x8] sm:$0xff]
      %v235 = vld [vmem:[%s4] sm:$0x1]
      %v237 = vlaneseq
      %v238 = vshrl.u32 %v237, 7
      %v239 = vsub.s32 0, %v238
      %v240 = vrot.slane %v235, %v239
      %v242 = vadd.f32 %v233, %v240
      %v243 = vadd.f32 %v234, %v240
      %v244 = vld [vmem:[%s5] sm:$0xff]
      %v245 = vld [vmem:[%s5 + $0x8] sm:$0xff]
      %v246 = vadd.f32 %v242, %v244
      %v247 = vadd.f32 %v243, %v245
      %248 = vst.msk [vmem:[#allocation3] sm:$0xff] %vm71, %v246
      %249 = vst.msk [vmem:[#allocation3 + $0x8] sm:$0xff] %vm71, %v247
      %v250 = vld [vmem:[%s6] sm:$0x1]
      %v251 = vld [vmem:[%s7] sm:$0x1]
      %v252 = vsel %vm71, %v246, 0.0
      %253 = vadd.xlane.f32.xlu0 %v252
      %v254 = vpop.xlane.xlu0 %253
      %v255 = vsel %vm71, %v247, 0.0
      %256 = vadd.xlane.f32.xlu0 %v255
      %v257 = vpop.xlane.xlu0 %256
      %v258 = vrcp.pop 32.0
      %v259 = vmul.f32 %v254, %v258
      %v260 = vmul.f32 %v257, %v258
      %v261 = vsub.f32 %v246, %v259
      %v262 = vsub.f32 %v247, %v260
      %v263 = vmul.f32 %v261, %v261
      %v264 = vmul.f32 %v262, %v262
      %v265 = vsel %vm71, %v263, 0.0
      %266 = vadd.xlane.f32.xlu0 %v265
      %v267 = vpop.xlane.xlu0 %266
      %v268 = vsel %vm71, %v264, 0.0
      %269 = vadd.xlane.f32.xlu0 %v268
      %v270 = vpop.xlane.xlu0 %269
      %v271 = vrcp.pop 31.0
      %v272 = vmul.f32 %v267, %v271
      %v273 = vmul.f32 %v270, %v271
      %v275 = vlaneseq
      %v276 = vshrl.u32 %v275, 7
      %v277 = vsub.s32 0, %v276
      %v278 = vrot.slane %v250, %v277
      %v280 = vmul.f32 %v278, %v261
      %v281 = vmul.f32 %v278, %v262
      %v282 = vrsqrt.pop %v272
      %v283 = vmul.f32 %v272, %v282
      %vm284 = vcmp.eq.f32.partialorder %v272, inf
      %v285 = vsel %vm284, %v272, %v283
      %vm286 = vcmp.eq.f32.partialorder %v272, 0.0
      %v287 = vand.u32 %v272, 2147483648
      %v288 = vsel %vm286, %v287, %v285
      %v289 = vrsqrt.pop %v273
      %v290 = vmul.f32 %v273, %v289
      %vm291 = vcmp.eq.f32.partialorder %v273, inf
      %v292 = vsel %vm291, %v273, %v290
      %vm293 = vcmp.eq.f32.partialorder %v273, 0.0
      %v294 = vand.u32 %v273, 2147483648
      %v295 = vsel %vm293, %v294, %v292
      %v296 = vadd.f32 %v288, 1e-06
      %v297 = vadd.f32 %v295, 1e-06
      %v298 = vrcp.pop %v296
      %v299 = vmul.f32 %v280, %v298
      %v300 = vrcp.pop %v297
      %v301 = vmul.f32 %v281, %v300
      %v303 = vlaneseq
      %v304 = vshrl.u32 %v303, 7
      %v305 = vsub.s32 0, %v304
      %v306 = vrot.slane %v251, %v305
      %v308 = vadd.f32 %v299, %v306
      %v309 = vadd.f32 %v301, %v306
      %310 = vst.msk [vmem:[#allocation5] sm:$0xff] %vm71, %v308
      %311 = vst.msk [vmem:[#allocation5 + $0x8] sm:$0xff] %vm71, %v309
    $region41: #{transformer_forward.17} parent=1 // pred_fallthru
      _
    // Predicated region
    $region42: #{transformer_forward.17} parent=1 // pred_check
      _
    $region43: #{transformer_forward.17} parent=1 // pred_check_branch
      %313 = sbr.rel (0) target = $region45
    $region44: #{transformer_forward.17} parent=1 // pred_region
      %s315 = ssub.s32 256, 256
      %316 = vsyncadd [#allocation4], %s315
      %s317 = sshll.u32 [#allocation3], 4
      %s318 = int_to_ptr.vmem [resolvable:$true] %s317
      %323 = dma.vmem_to_hbm [thread:$0]  %s318, 256, %s8, [#allocation4], 128, 128, 8
    $region45: #{transformer_forward.17} parent=1 // pred_fallthru
      _
    // Predicated region
    $region46: #{transformer_forward.17} parent=1 // pred_check
      _
    $region47: #{transformer_forward.17} parent=1 // pred_check_branch
      %325 = sbr.rel (0) target = $region49
    $region48: #{transformer_forward.17} parent=1 // pred_region
      %s327 = ssub.s32 256, 256
      %328 = vsyncadd [#allocation6], %s327
      %s329 = sshll.u32 [#allocation5], 4
      %s330 = int_to_ptr.vmem [resolvable:$true] %s329
      %335 = dma.vmem_to_hbm [thread:$0]  %s330, 256, %s9, [#allocation6], 128, 128, 8
    $region49: #{transformer_forward.17} parent=1 // pred_fallthru
      _
    // Predicated region
    $region50: #{transformer_forward.17} parent=1 // pred_check
      _
    $region51: #{transformer_forward.17} parent=1 // pred_check_branch
      %337 = sbr.rel (0) target = $region53
    $region52: #{transformer_forward.17} parent=1 // pred_region
      %338 = dma.done [#allocation4], 256
    $region53: #{transformer_forward.17} parent=1 // pred_fallthru
      _
    // Predicated region
    $region54: #{transformer_forward.17} parent=1 // pred_check
      _
    $region55: #{transformer_forward.17} parent=1 // pred_check_branch
      %340 = sbr.rel (0) target = $region57
    $region56: #{transformer_forward.17} parent=1 // pred_region
      %341 = dma.done [#allocation6], 256
    $region57: #{transformer_forward.17} parent=1 // pred_fallthru
      _
    %342 = vsyncpa [#allocation4], 1
    %343 = vsyncpa [#allocation6], 1

// kernel: transformer_forward.13
$region0: #{transformer_forward.13}
  #allocation0 [shape = 'u32[]', space=smem, size = 0x4, offset = 0x4, fixed_abs, tag = 'smem constant byte address 0x4 - core index']
  #allocation1 [shape = 'u32[144,128]{1,0:T(1,128)}', space=vmem, size = 0x12000, scoped, tag = 'internal scratch']
  #allocation2 [shape = 'f32[16,32]{1,0:T(8,128)}', space=vmem, size = 0x2000, scoped, tag = 'scratch operand']
  %s0 = inlined_call_operand.vmem [shape: bf16[16,32], index: 0, kind: input, shape index: {}]
  %s1 = inlined_call_operand.vmem [shape: bf16[32,128], index: 1, kind: input, shape index: {}]
  %s2 = inlined_call_operand.vmem [shape: f32[1,128], index: 2, kind: input, shape index: {}]
  %s3 = inlined_call_operand.vmem [shape: bf16[128,32], index: 3, kind: input, shape index: {}]
  %s4 = inlined_call_operand.vmem [shape: f32[1,32], index: 4, kind: input, shape index: {}]
  %s5 = inlined_call_operand.vmem [shape: f32[16,32], index: 5, kind: input, shape index: {}]
  %s6 = inlined_call_operand.vmem [shape: f32[1,32], index: 6, kind: input, shape index: {}]
  %s7 = inlined_call_operand.vmem [shape: f32[1,32], index: 7, kind: input, shape index: {}]
  %s8 = inlined_call_operand.vmem [shape: f32[16,32], index: 8, kind: output, shape index: {0}]
  %s9 = inlined_call_operand.vmem [shape: bf16[16,32], index: 9, kind: output, shape index: {1}]
  %10 = xla_tuple %s8, %s9
  %s11 = sld [smem:[#allocation0]]
  $region58: #{transformer_forward.13} parent=0
    _
  %s13 = ssub.s32 1, %s11
  %s14 = scalar_select 0, %s13, %s11
  // Predicated region
  $region2: #{transformer_forward.13} parent=0 // pred_check
    _
  $region3: #{transformer_forward.13} parent=0 // pred_check_branch
    %16 = sbr.rel (0) target = $region5
  $region4: #{transformer_forward.13} parent=0 // pred_region
    _
  $region5: #{transformer_forward.13} parent=0 // pred_fallthru
    _
  // Predicated region
  $region6: #{transformer_forward.13} parent=0 // pred_check
    _
  $region7: #{transformer_forward.13} parent=0 // pred_check_branch
    %18 = sbr.rel (0) target = $region9
  $region8: #{transformer_forward.13} parent=0 // pred_region
    _
  $region9: #{transformer_forward.13} parent=0 // pred_fallthru
    _
  // Predicated region
  $region10: #{transformer_forward.13} parent=0 // pred_check
    _
  $region11: #{transformer_forward.13} parent=0 // pred_check_branch
    %20 = sbr.rel (0) target = $region13
  $region12: #{transformer_forward.13} parent=0 // pred_region
    _
  $region13: #{transformer_forward.13} parent=0 // pred_fallthru
    _
  // Predicated region
  $region14: #{transformer_forward.13} parent=0 // pred_check
    _
  $region15: #{transformer_forward.13} parent=0 // pred_check_branch
    %22 = sbr.rel (0) target = $region17
  $region16: #{transformer_forward.13} parent=0 // pred_region
    _
  $region17: #{transformer_forward.13} parent=0 // pred_fallthru
    _
  // Predicated region
  $region18: #{transformer_forward.13} parent=0 // pred_check
    _
  $region19: #{transformer_forward.13} parent=0 // pred_check_branch
    %24 = sbr.rel (0) target = $region21
  $region20: #{transformer_forward.13} parent=0 // pred_region
    _
  $region21: #{transformer_forward.13} parent=0 // pred_fallthru
    _
  // Predicated region
  $region22: #{transformer_forward.13} parent=0 // pred_check
    _
  $region23: #{transformer_forward.13} parent=0 // pred_check_branch
    %26 = sbr.rel (0) target = $region25
  $region24: #{transformer_forward.13} parent=0 // pred_region
    _
  $region25: #{transformer_forward.13} parent=0 // pred_fallthru
    _
  // Predicated region
  $region26: #{transformer_forward.13} parent=0 // pred_check
    _
  $region27: #{transformer_forward.13} parent=0 // pred_check_branch
    %28 = sbr.rel (0) target = $region29
  $region28: #{transformer_forward.13} parent=0 // pred_region
    _
  $region29: #{transformer_forward.13} parent=0 // pred_fallthru
    _
  // Predicated region
  $region30: #{transformer_forward.13} parent=0 // pred_check
    _
  $region31: #{transformer_forward.13} parent=0 // pred_check_branch
    %30 = sbr.rel (0) target = $region33
  $region32: #{transformer_forward.13} parent=0 // pred_region
    _
  $region33: #{transformer_forward.13} parent=0 // pred_fallthru
    _
  %p32 = scmp.eq.s32.totalorder 0, 0
  // Predicated region
  $region34: #{transformer_forward.13} parent=0 // pred_check
    %p33 = pneg %p32
  $region35: #{transformer_forward.13} parent=0 // pred_check_branch
    %35 = sbr.rel (%p33) target = $region37
  $region36: #{transformer_forward.13} parent=0 // pred_region
    %vm36 = vcmask 261120
    %37 = vst.msk [vmem:[#allocation2] sm:$0xff] %vm36, 0.0
    %38 = vst.msk [vmem:[#allocation2 + $0x8] sm:$0xff] %vm36, 0.0
  $region37: #{transformer_forward.13} parent=0 // pred_fallthru
    _
  %v39 = vld [vmem:[%s0] sm:$0xf]
  %v40 = vld [vmem:[%s0 + $0x4] sm:$0xf]
  %v41 = vld [vmem:[%s1] sm:$0xf]
  %v42 = vld [vmem:[%s1 + $0x4] sm:$0xf]
  %v43 = vld [vmem:[%s1 + $0x8] sm:$0xf]
  %v44 = vld [vmem:[%s1 + $0xc] sm:$0xf]
  %v45 = vld [vmem:[%s2] sm:$0x1]
  %v47 = vlaneseq
  %v48 = vshrl.u32 %v47, 7
  %v49 = vsub.s32 0, %v48
  %v50 = vrot.slane %v45, %v49
  %v54 = vunpack.c.l.b16 %v39
  %v55 = vunpack.c.l.b16 %v40
  %v56 = vpack.c.b16 %v55, %v54
  %v61 = vunpack.c.l.b16 %v41
  %v62 = vunpack.c.l.b16 %v42
  %v63 = vunpack.c.l.b16 %v43
  %v64 = vunpack.c.l.b16 %v44
  %v65 = vpack.c.b16 %v62, %v61
  %v66 = vpack.c.b16 %v64, %v63
  %vm69 = vcmask 261120
  %v71 = vsel %vm69, %v56, 0
  %73 = vmatprep.subr.bf16.mxu0 0
  %74 = vmatpush1.bf16.msra.mxu0 0
  %75 = vmatprep.subr.bf16.mxu0 0
  %76 = vmatpush1.bf16.msra.mxu0 0
  %77 = vmatprep.subr.bf16.mxu0 0
  %78 = vmatpush1.bf16.msra.mxu0 0
  %79 = vmatprep.subr.bf16.mxu0 0
  %80 = vmatpush1.bf16.msra.mxu0 0
  %81 = vmatprep.subr.bf16.mxu0 0
  %82 = vmatpush1.bf16.msra.mxu0 0
  %83 = vmatprep.subr.bf16.mxu0 0
  %84 = vmatpush1.bf16.msra.mxu0 0
  %85 = vmatprep.subr.bf16.mxu0 0
  %86 = vmatpush1.bf16.msra.mxu0 %v66
  %87 = vmatprep.subr.bf16.mxu0 0
  %88 = vmatpush1.bf16.msra.mxu0 %v65
  %89 = vmatprep.subr.bf16.mxu0 0
  %90 = vmatpush2.bf16.msra.mxu0 0
  %91 = vmatprep.subr.bf16.mxu0 0
  %92 = vmatpush2.bf16.msra.mxu0 0
  %93 = vmatprep.subr.bf16.mxu0 0
  %94 = vmatpush2.bf16.msra.mxu0 0
  %95 = vmatprep.subr.bf16.mxu0 0
  %96 = vmatpush2.bf16.msra.mxu0 0
  %97 = vmatprep.subr.bf16.mxu0 0
  %98 = vmatpush2.bf16.msra.mxu0 0
  %99 = vmatprep.subr.bf16.mxu0 0
  %100 = vmatpush2.bf16.msra.mxu0 0
  %101 = vmatprep.subr.bf16.mxu0 0
  %102 = vmatpush2.bf16.msra.mxu0 0
  %103 = vmatprep.subr.bf16.mxu0 0
  %104 = vmatpush2.bf16.msra.mxu0 0
  %105 = vmatprep.mubr.bf16.mxu0 0
  %106 = vmatmul.mubr.bf16.gmra.mxu0 %v71
  %v107 = vpop.f32.mrf.mxu0
  %v108 = vadd.f32 %v50, %v107
  %v109 = vpop.f32.mrf.mxu0
  %v110 = vpop.f32.mrf.mxu0
  %v111 = vadd.f32 %v50, %v110
  %v112 = vpop.f32.mrf.mxu0
  %113 = vdwg.mxu0
  %v114 = vmax.f32 %v108, 0.0
  %v115 = vmax.f32 %v111, 0.0
  %v116 = vld [vmem:[#allocation2] sm:$0xff]
  %v117 = vld [vmem:[#allocation2 + $0x8] sm:$0xff]
  %v118 = vpack.c.bf16 %v115, %v114
  %v119 = vld [vmem:[%s3] sm:$0xf]
  %v120 = vld [vmem:[%s3 + $0x4] sm:$0xf]
  %v121 = vld [vmem:[%s3 + $0x8] sm:$0xf]
  %v122 = vld [vmem:[%s3 + $0xc] sm:$0xf]
  %v123 = vld [vmem:[%s3 + $0x10] sm:$0xf]
  %v124 = vld [vmem:[%s3 + $0x14] sm:$0xf]
  %v125 = vld [vmem:[%s3 + $0x18] sm:$0xf]
  %v126 = vld [vmem:[%s3 + $0x1c] sm:$0xf]
  %v127 = vld [vmem:[%s3 + $0x20] sm:$0xf]
  %v128 = vld [vmem:[%s3 + $0x24] sm:$0xf]
  %v129 = vld [vmem:[%s3 + $0x28] sm:$0xf]
  %v130 = vld [vmem:[%s3 + $0x2c] sm:$0xf]
  %v131 = vld [vmem:[%s3 + $0x30] sm:$0xf]
  %v132 = vld [vmem:[%s3 + $0x34] sm:$0xf]
  %v133 = vld [vmem:[%s3 + $0x38] sm:$0xf]
  %v134 = vld [vmem:[%s3 + $0x3c] sm:$0xf]
  %v151 = vunpack.c.l.b16 %v119
  %v152 = vunpack.c.l.b16 %v120
  %v153 = vunpack.c.l.b16 %v121
  %v154 = vunpack.c.l.b16 %v122
  %v155 = vunpack.c.l.b16 %v123
  %v156 = vunpack.c.l.b16 %v124
  %v157 = vunpack.c.l.b16 %v125
  %v158 = vunpack.c.l.b16 %v126
  %v159 = vunpack.c.l.b16 %v127
  %v160 = vunpack.c.l.b16 %v128
  %v161 = vunpack.c.l.b16 %v129
  %v162 = vunpack.c.l.b16 %v130
  %v163 = vunpack.c.l.b16 %v131
  %v164 = vunpack.c.l.b16 %v132
  %v165 = vunpack.c.l.b16 %v133
  %v166 = vunpack.c.l.b16 %v134
  %v167 = vpack.c.b16 %v152, %v151
  %v168 = vpack.c.b16 %v154, %v153
  %v169 = vpack.c.b16 %v156, %v155
  %v170 = vpack.c.b16 %v158, %v157
  %v171 = vpack.c.b16 %v160, %v159
  %v172 = vpack.c.b16 %v162, %v161
  %v173 = vpack.c.b16 %v164, %v163
  %v174 = vpack.c.b16 %v166, %v165
  %183 = vmatprep.subr.bf16.mxu0 0
  %184 = vmatpush1.bf16.msra.mxu0 %v174
  %185 = vmatprep.subr.bf16.mxu0 0
  %186 = vmatpush1.bf16.msra.mxu0 %v173
  %187 = vmatprep.subr.bf16.mxu0 0
  %188 = vmatpush1.bf16.msra.mxu0 %v172
  %189 = vmatprep.subr.bf16.mxu0 0
  %190 = vmatpush1.bf16.msra.mxu0 %v171
  %191 = vmatprep.subr.bf16.mxu0 0
  %192 = vmatpush1.bf16.msra.mxu0 %v170
  %193 = vmatprep.subr.bf16.mxu0 0
  %194 = vmatpush1.bf16.msra.mxu0 %v169
  %195 = vmatprep.subr.bf16.mxu0 0
  %196 = vmatpush1.bf16.msra.mxu0 %v168
  %197 = vmatprep.subr.bf16.mxu0 0
  %198 = vmatpush1.bf16.msra.mxu0 %v167
  %199 = vmatprep.subr.bf16.mxu0 0
  %200 = vmatpush2.bf16.msra.mxu0 0
  %201 = vmatprep.subr.bf16.mxu0 0
  %202 = vmatpush2.bf16.msra.mxu0 0
  %203 = vmatprep.subr.bf16.mxu0 0
  %204 = vmatpush2.bf16.msra.mxu0 0
  %205 = vmatprep.subr.bf16.mxu0 0
  %206 = vmatpush2.bf16.msra.mxu0 0
  %207 = vmatprep.subr.bf16.mxu0 0
  %208 = vmatpush2.bf16.msra.mxu0 0
  %209 = vmatprep.subr.bf16.mxu0 0
  %210 = vmatpush2.bf16.msra.mxu0 0
  %211 = vmatprep.subr.bf16.mxu0 0
  %212 = vmatpush2.bf16.msra.mxu0 0
  %213 = vmatprep.subr.bf16.mxu0 0
  %214 = vmatpush2.bf16.msra.mxu0 0
  %215 = vmatprep.mubr.bf16.mxu0 0
  %216 = vmatmul.mubr.bf16.gmra.mxu0 %v118
  %v217 = vpop.f32.mrf.mxu0
  %v218 = vadd.f32 0.0, %v217
  %v219 = vpop.f32.mrf.mxu0
  %v220 = vpop.f32.mrf.mxu0
  %v221 = vadd.f32 0.0, %v220
  %v222 = vpop.f32.mrf.mxu0
  %223 = vdwg.mxu0
  %v224 = vadd.f32 %v116, %v218
  %v225 = vadd.f32 %v117, %v221
  %226 = vst.msk [vmem:[#allocation2] sm:$0xff] %vm69, %v224
  %227 = vst.msk [vmem:[#allocation2 + $0x8] sm:$0xff] %vm69, %v225
  // Predicated region
  $region38: #{transformer_forward.13} parent=0 // pred_check
    %p228 = pneg %p32
  $region39: #{transformer_forward.13} parent=0 // pred_check_branch
    %230 = sbr.rel (%p228) target = $region41
  $region40: #{transformer_forward.13} parent=0 // pred_region
    %v231 = vld [vmem:[#allocation2] sm:$0xff]
    %v232 = vld [vmem:[#allocation2 + $0x8] sm:$0xff]
    %v233 = vld [vmem:[%s4] sm:$0x1]
    %v235 = vlaneseq
    %v236 = vshrl.u32 %v235, 7
    %v237 = vsub.s32 0, %v236
    %v238 = vrot.slane %v233, %v237
    %v240 = vadd.f32 %v231, %v238
    %v241 = vadd.f32 %v232, %v238
    %v242 = vld [vmem:[%s5] sm:$0xff]
    %v243 = vld [vmem:[%s5 + $0x8] sm:$0xff]
    %v244 = vadd.f32 %v240, %v242
    %v245 = vadd.f32 %v241, %v243
    %246 = vst.msk [vmem:[%s8] sm:$0xff] %vm69, %v244
    %247 = vst.msk [vmem:[%s8 + $0x8] sm:$0xff] %vm69, %v245
    %v248 = vld [vmem:[%s6] sm:$0x1]
    %v249 = vld [vmem:[%s7] sm:$0x1]
    %v250 = vsel %vm69, %v244, 0.0
    %251 = vadd.xlane.f32.xlu0 %v250
    %v252 = vpop.xlane.xlu0 %251
    %v253 = vsel %vm69, %v245, 0.0
    %254 = vadd.xlane.f32.xlu0 %v253
    %v255 = vpop.xlane.xlu0 %254
    %v256 = vrcp.pop 32.0
    %v257 = vmul.f32 %v252, %v256
    %v258 = vmul.f32 %v255, %v256
    %v259 = vsub.f32 %v244, %v257
    %v260 = vsub.f32 %v245, %v258
    %v261 = vmul.f32 %v259, %v259
    %v262 = vmul.f32 %v260, %v260
    %v263 = vsel %vm69, %v261, 0.0
    %264 = vadd.xlane.f32.xlu0 %v263
    %v265 = vpop.xlane.xlu0 %264
    %v266 = vsel %vm69, %v262, 0.0
    %267 = vadd.xlane.f32.xlu0 %v266
    %v268 = vpop.xlane.xlu0 %267
    %v269 = vrcp.pop 31.0
    %v270 = vmul.f32 %v265, %v269
    %v271 = vmul.f32 %v268, %v269
    %v273 = vlaneseq
    %v274 = vshrl.u32 %v273, 7
    %v275 = vsub.s32 0, %v274
    %v276 = vrot.slane %v248, %v275
    %v278 = vmul.f32 %v276, %v259
    %v279 = vmul.f32 %v276, %v260
    %v280 = vrsqrt.pop %v270
    %v281 = vmul.f32 %v270, %v280
    %vm282 = vcmp.eq.f32.partialorder %v270, inf
    %v283 = vsel %vm282, %v270, %v281
    %vm284 = vcmp.eq.f32.partialorder %v270, 0.0
    %v285 = vand.u32 %v270, 2147483648
    %v286 = vsel %vm284, %v285, %v283
    %v287 = vrsqrt.pop %v271
    %v288 = vmul.f32 %v271, %v287
    %vm289 = vcmp.eq.f32.partialorder %v271, inf
    %v290 = vsel %vm289, %v271, %v288
    %vm291 = vcmp.eq.f32.partialorder %v271, 0.0
    %v292 = vand.u32 %v271, 2147483648
    %v293 = vsel %vm291, %v292, %v290
    %v294 = vadd.f32 %v286, 1e-06
    %v295 = vadd.f32 %v293, 1e-06
    %v296 = vrcp.pop %v294
    %v297 = vmul.f32 %v278, %v296
    %v298 = vrcp.pop %v295
    %v299 = vmul.f32 %v279, %v298
    %v301 = vlaneseq
    %v302 = vshrl.u32 %v301, 7
    %v303 = vsub.s32 0, %v302
    %v304 = vrot.slane %v249, %v303
    %v306 = vadd.f32 %v297, %v304
    %v307 = vadd.f32 %v299, %v304
    %v308 = vpack.c.bf16 %v307, %v306
    %v310 = vunpack.c.l.b16 %v308
    %v311 = vunpack.c.h.b16 %v308
    %v312 = vpack.c.b16 %v310, %v310
    %v313 = vpack.c.b16 %v311, %v311
    %vm316 = vcmask 257024
    %317 = vst.msk [vmem:[%s9] sm:$0xf] %vm316, %v312
    %318 = vst.msk [vmem:[%s9 + $0x4] sm:$0xf] %vm316, %v313
  $region41: #{transformer_forward.13} parent=0 // pred_fallthru
    _
  // Predicated region
  $region42: #{transformer_forward.13} parent=0 // pred_check
    _
  $region43: #{transformer_forward.13} parent=0 // pred_check_branch
    %320 = sbr.rel (0) target = $region45
  $region44: #{transformer_forward.13} parent=0 // pred_region
    _
  $region45: #{transformer_forward.13} parent=0 // pred_fallthru
    _
  // Predicated region
  $region46: #{transformer_forward.13} parent=0 // pred_check
    _
  $region47: #{transformer_forward.13} parent=0 // pred_check_branch
    %322 = sbr.rel (0) target = $region49
  $region48: #{transformer_forward.13} parent=0 // pred_region
    _
  $region49: #{transformer_forward.13} parent=0 // pred_fallthru
    _
  // Predicated region
  $region50: #{transformer_forward.13} parent=0 // pred_check
    _
  $region51: #{transformer_forward.13} parent=0 // pred_check_branch
    %324 = sbr.rel (0) target = $region53
  $region52: #{transformer_forward.13} parent=0 // pred_region
    _
  $region53: #{transformer_forward.13} parent=0 // pred_fallthru
    _
  // Predicated region
  $region54: #{transformer_forward.13} parent=0 // pred_check
    _
  $region55: #{transformer_forward.13} parent=0 // pred_check_branch
    %326 = sbr.rel (0) target = $region57
  $region56: #{transformer_forward.13} parent=0 // pred_region
    _
  $region57: #{transformer_forward.13} parent=0 // pred_fallthru
    _

</llo_original>
